<compile_context>
chip_gen: v6e
topology: v6e:2x2x1
jax: 0.10.0
libtpu: 0.0.40
codegen_flags: <defaults>
</compile_context>

<pallas_src>
import functools

import jax
import jax.numpy as jnp
from jax import lax
from jax.experimental import pallas as pl
from jax.experimental.pallas import tpu as pltpu
import numpy as np


def rrn_kernel(idx_ref,      # (B, T)    int32 token ids            [SMEM]
               embed_ref,    # (V, 1, E) embedding table            [VMEM]
               w_ih_f_ref,   # (E, H)    forward input->hidden (transposed vs torch)
               w_ih_b_ref,   # (E, H)    backward input->hidden
               w_hh_ref,     # (2H, 2H)  block-diag(w_hh_f, w_hh_b)
               b_ref,        # (1, 2H)   concat(b_ih_f+b_hh_f, b_ih_b+b_hh_b)
               w_lin_ref,    # (2H, D)   linear weight (transposed vs torch)
               b_lin_ref,    # (1, D)
               out_ref,      # (B, D)    logits
               ef_ref,       # (T*B, E)  scratch: embedded seq, forward time order
               eb_ref):      # (T*B, E)  scratch: embedded seq, reversed time order
    B, T = idx_ref.shape
    E = embed_ref.shape[-1]
    H = w_ih_f_ref.shape[-1]

    # --- 1) embedding gather fused into the kernel (scalar-indexed row copies) ---------
    #     ef row t*B+b = embed[idx[b, t]]       (forward time order, time-major)
    #     eb row t*B+b = embed[idx[b, T-1-t]]   (time-reversed, feeds the backward dir)
    for t in range(T):
        for b in range(B):
            row = embed_ref[idx_ref[b, t]]                      # (1, E), dynamic lead idx
            ef_ref[pl.ds(t * B + b, 1), :] = row
            eb_ref[pl.ds((T - 1 - t) * B + b, 1), :] = row

    # --- 2) hoisted input projection, biases folded in (off the serial critical path) ---
    xf = jnp.dot(ef_ref[...], w_ih_f_ref[...], preferred_element_type=jnp.float32)  # (T*B,H)
    xb = jnp.dot(eb_ref[...], w_ih_b_ref[...], preferred_element_type=jnp.float32)  # (T*B,H)
    x_all = jnp.concatenate([xf, xb], axis=-1) + b_ref[...]                          # (T*B,2H)

    # --- 3) fused bidirectional ReLU recurrence, fully unrolled ------------------------
    w_hh = w_hh_ref[...]                                        # (2H, 2H) block-diagonal
    h = jnp.zeros((B, 2 * H), jnp.float32)
    # relu => every hidden state is >= 0, so 0 is an exact identity for the running max.
    mx = jnp.zeros((B, 2 * H), jnp.float32)
    for t in range(T):
        x_t = x_all[t * B:(t + 1) * B, :]                       # static (B, 2H) slice
        h = jnp.maximum(
            x_t + jnp.dot(h, w_hh, preferred_element_type=jnp.float32), 0.0)
        mx = jnp.maximum(mx, h)

    # --- 4) tanh hoisted out of the loop (monotonic), then the final linear -------------
    pooled = jnp.tanh(mx)                                       # (B, 2H)
    out_ref[...] = (
        jnp.dot(pooled, w_lin_ref[...], preferred_element_type=jnp.float32)
        + b_lin_ref[...])


def pack_params(embed_table, params):
    """One-time parameter packing (tiny, done outside the hot path)."""
    (w_ih_f, w_hh_f, b_f, w_ih_b, w_hh_b, b_b, w_lin, b_lin) = params
    H = w_hh_f.shape[0]
    w_hh_block = jnp.zeros((2 * H, 2 * H), jnp.float32)
    w_hh_block = w_hh_block.at[:H, :H].set(w_hh_f)
    w_hh_block = w_hh_block.at[H:, H:].set(w_hh_b)
    b_comb = jnp.concatenate([b_f, b_b], axis=-1)               # (1, 2H)
    embed3 = embed_table[:, None, :]                            # (V, 1, E): leading-axis indexable
    return embed3, (w_ih_f, w_ih_b, w_hh_block, b_comb, w_lin, b_lin)


@functools.partial(jax.jit, static_argnames=("data_dim",))
def rrn_forward(x_idx, embed3, packed, data_dim):
    """x_idx: (B, T) int32 token indices. Everything else is pre-packed."""
    (w_ih_f, w_ih_b, w_hh_block, b_comb, w_lin, b_lin) = packed
    B, T = x_idx.shape
    E = embed3.shape[-1]

    smem = pl.BlockSpec(memory_space=pltpu.MemorySpace.SMEM)
    vmem = pl.BlockSpec(memory_space=pltpu.MemorySpace.VMEM)

    out = pl.pallas_call(
        rrn_kernel,
        out_shape=jax.ShapeDtypeStruct((B, data_dim), jnp.float32),
        in_specs=[smem, vmem, vmem, vmem, vmem, vmem, vmem, vmem],
        out_specs=vmem,
        scratch_shapes=[pltpu.VMEM((T * B, E), jnp.float32),
                        pltpu.VMEM((T * B, E), jnp.float32)],
    )(x_idx, embed3, w_ih_f, w_ih_b, w_hh_block, b_comb, w_lin, b_lin)
    return out


def reference_forward(x_idx, embed_table, params):
    """Pure-JAX reference mirroring the PyTorch forward."""
    (w_ih_f, w_hh_f, b_f, w_ih_b, w_hh_b, b_b, w_lin, b_lin) = params
    emb = embed_table[x_idx]                         # (B, T, E)
    B, T, _ = emb.shape
    H = w_hh_f.shape[0]

    def run_dir(w_ih, w_hh, b, seq):                 # seq: (T, B, E)
        def step(h, x_t):
            h = jnp.maximum(x_t @ w_ih + h @ w_hh + b, 0.0)
            return h, h
        _, hs = lax.scan(step, jnp.zeros((B, H), jnp.float32), seq)
        return hs                                    # (T, B, H)

    seq = jnp.transpose(emb, (1, 0, 2))
    hs_f = run_dir(w_ih_f, w_hh_f, b_f, seq)
    hs_b = run_dir(w_ih_b, w_hh_b, b_b, seq[::-1])[::-1]
    out = jnp.concatenate([hs_f, hs_b], axis=-1)     # (T, B, 2H)
    out = jnp.transpose(out, (1, 0, 2))              # (B, T, 2H)
    pooled = jnp.max(jnp.tanh(out), axis=1)          # (B, 2H) == max_pool1d over T
    return pooled @ w_lin + b_lin


if __name__ == "__main__":
    # Small, self-consistent shapes: embed_dim must equal 2*hidden_size (see note above).
    B, T = 2, 8
    E, H = 32, 16
    data_num, data_dim, padding = 50, 10, 0

    key = jax.random.PRNGKey(0)
    ks = jax.random.split(key, 10)

    # Deterministic synthetic parameters (PyTorch-style uniform init scales).
    embed_table = jax.random.normal(ks[0], (data_num, E), jnp.float32) * 0.1
    embed_table = embed_table.at[padding].set(0.0)   # padding_idx row zeroed

    s = 1.0 / np.sqrt(H)
    w_ih_f = jax.random.uniform(ks[1], (E, H), jnp.float32, -s, s)
    w_hh_f = jax.random.uniform(ks[2], (H, H), jnp.float32, -s, s)
    b_f = jax.random.uniform(ks[3], (1, H), jnp.float32, -s, s)      # b_ih + b_hh fused
    w_ih_b = jax.random.uniform(ks[4], (E, H), jnp.float32, -s, s)
    w_hh_b = jax.random.uniform(ks[5], (H, H), jnp.float32, -s, s)
    b_b = jax.random.uniform(ks[6], (1, H), jnp.float32, -s, s)

    sl = 1.0 / np.sqrt(2 * H)
    w_lin = jax.random.uniform(ks[7], (2 * H, data_dim), jnp.float32, -sl, sl)
    b_lin = jax.random.uniform(ks[8], (1, data_dim), jnp.float32, -sl, sl)

    params = (w_ih_f, w_hh_f, b_f, w_ih_b, w_hh_b, b_b, w_lin, b_lin)

    # Input token indices (include some padding tokens; padding rows still participate in
    # the max-pool, matching the PyTorch module).
    x_idx = jax.random.randint(ks[9], (B, T), 0, data_num, jnp.int32)
    x_idx = x_idx.at[:, -2:].set(padding)

    embed3, packed = pack_params(embed_table, params)
    logit = rrn_forward(x_idx, embed3, packed, data_dim)
    logit = jax.block_until_ready(logit)

    ref = jax.block_until_ready(reference_forward(x_idx, embed_table, params))
    assert logit.shape == (B, data_dim), logit.shape
    np.testing.assert_allclose(np.asarray(logit), np.asarray(ref), rtol=1e-5, atol=1e-5)

    print("KERNEL_OK")
</pallas_src>

<mosaic_0001>
module attributes {stable_mosaic.version = 11 : i64} {
  func.func @rrn_kernel(%arg0: memref<2x8xi32, #tpu.memory_space<smem>>, %arg1: memref<50x1x32xf32, #tpu.memory_space<vmem>>, %arg2: memref<32x16xf32, #tpu.memory_space<vmem>>, %arg3: memref<32x16xf32, #tpu.memory_space<vmem>>, %arg4: memref<32x32xf32, #tpu.memory_space<vmem>>, %arg5: memref<1x32xf32, #tpu.memory_space<vmem>>, %arg6: memref<32x10xf32, #tpu.memory_space<vmem>>, %arg7: memref<1x10xf32, #tpu.memory_space<vmem>>, %arg8: memref<2x10xf32, #tpu.memory_space<vmem>>, %arg9: memref<16x32xf32, #tpu.memory_space<vmem>>, %arg10: memref<16x32xf32, #tpu.memory_space<vmem>>) attributes {dimension_semantics = [], scalar_prefetch = 0 : i64, scratch_operands = 2 : i64, tpu.core_type = #tpu.core_type<tc>} {
    %c0 = arith.constant 0 : index
    %c0_0 = arith.constant 0 : index
    %0 = memref.load %arg0[%c0, %c0_0] : memref<2x8xi32, #tpu.memory_space<smem>>
    %1 = arith.index_cast %0 : i32 to index
    %c0_1 = arith.constant 0 : index
    %c0_2 = arith.constant 0 : index
    %2 = vector.load %arg1[%1, %c0_1, %c0_2] : memref<50x1x32xf32, #tpu.memory_space<vmem>>, vector<1x1x32xf32>
    %3 = vector.shape_cast %2 : vector<1x1x32xf32> to vector<1x32xf32>
    %c0_3 = arith.constant 0 : index
    %c0_4 = arith.constant 0 : index
    %4 = vector.load %arg9[%c0_3, %c0_4] : memref<16x32xf32, #tpu.memory_space<vmem>>, vector<1x32xf32>
    tpu.vector_store %arg9[%c0_3, %c0_4], %3 {strides = array<i32>} : memref<16x32xf32, #tpu.memory_space<vmem>>, vector<1x32xf32>,
    %c14 = arith.constant 14 : index
    %c0_5 = arith.constant 0 : index
    %5 = vector.load %arg10[%c14, %c0_5] : memref<16x32xf32, #tpu.memory_space<vmem>>, vector<1x32xf32>
    tpu.vector_store %arg10[%c14, %c0_5], %3 {strides = array<i32>} : memref<16x32xf32, #tpu.memory_space<vmem>>, vector<1x32xf32>,
    %c1 = arith.constant 1 : index
    %c0_6 = arith.constant 0 : index
    %6 = memref.load %arg0[%c1, %c0_6] : memref<2x8xi32, #tpu.memory_space<smem>>
    %7 = arith.index_cast %6 : i32 to index
    %c0_7 = arith.constant 0 : index
    %c0_8 = arith.constant 0 : index
    %8 = vector.load %arg1[%7, %c0_7, %c0_8] : memref<50x1x32xf32, #tpu.memory_space<vmem>>, vector<1x1x32xf32>
    %9 = vector.shape_cast %8 : vector<1x1x32xf32> to vector<1x32xf32>
    %c1_9 = arith.constant 1 : index
    %c0_10 = arith.constant 0 : index
    %10 = vector.load %arg9[%c1_9, %c0_10] : memref<16x32xf32, #tpu.memory_space<vmem>>, vector<1x32xf32>
    tpu.vector_store %arg9[%c1_9, %c0_10], %9 {strides = array<i32>} : memref<16x32xf32, #tpu.memory_space<vmem>>, vector<1x32xf32>,
    %c15 = arith.constant 15 : index
    %c0_11 = arith.constant 0 : index
    %11 = vector.load %arg10[%c15, %c0_11] : memref<16x32xf32, #tpu.memory_space<vmem>>, vector<1x32xf32>
    tpu.vector_store %arg10[%c15, %c0_11], %9 {strides = array<i32>} : memref<16x32xf32, #tpu.memory_space<vmem>>, vector<1x32xf32>,
    %c0_12 = arith.constant 0 : index
    %c1_13 = arith.constant 1 : index
    %12 = memref.load %arg0[%c0_12, %c1_13] : memref<2x8xi32, #tpu.memory_space<smem>>
    %13 = arith.index_cast %12 : i32 to index
    %c0_14 = arith.constant 0 : index
    %c0_15 = arith.constant 0 : index
    %14 = vector.load %arg1[%13, %c0_14, %c0_15] : memref<50x1x32xf32, #tpu.memory_space<vmem>>, vector<1x1x32xf32>
    %15 = vector.shape_cast %14 : vector<1x1x32xf32> to vector<1x32xf32>
    %c2 = arith.constant 2 : index
    %c0_16 = arith.constant 0 : index
    %16 = vector.load %arg9[%c2, %c0_16] : memref<16x32xf32, #tpu.memory_space<vmem>>, vector<1x32xf32>
    tpu.vector_store %arg9[%c2, %c0_16], %15 {strides = array<i32>} : memref<16x32xf32, #tpu.memory_space<vmem>>, vector<1x32xf32>,
    %c12 = arith.constant 12 : index
    %c0_17 = arith.constant 0 : index
    %17 = vector.load %arg10[%c12, %c0_17] : memref<16x32xf32, #tpu.memory_space<vmem>>, vector<1x32xf32>
    tpu.vector_store %arg10[%c12, %c0_17], %15 {strides = array<i32>} : memref<16x32xf32, #tpu.memory_space<vmem>>, vector<1x32xf32>,
    %c1_18 = arith.constant 1 : index
    %c1_19 = arith.constant 1 : index
    %18 = memref.load %arg0[%c1_18, %c1_19] : memref<2x8xi32, #tpu.memory_space<smem>>
    %19 = arith.index_cast %18 : i32 to index
    %c0_20 = arith.constant 0 : index
    %c0_21 = arith.constant 0 : index
    %20 = vector.load %arg1[%19, %c0_20, %c0_21] : memref<50x1x32xf32, #tpu.memory_space<vmem>>, vector<1x1x32xf32>
    %21 = vector.shape_cast %20 : vector<1x1x32xf32> to vector<1x32xf32>
    %c3 = arith.constant 3 : index
    %c0_22 = arith.constant 0 : index
    %22 = vector.load %arg9[%c3, %c0_22] : memref<16x32xf32, #tpu.memory_space<vmem>>, vector<1x32xf32>
    tpu.vector_store %arg9[%c3, %c0_22], %21 {strides = array<i32>} : memref<16x32xf32, #tpu.memory_space<vmem>>, vector<1x32xf32>,
    %c13 = arith.constant 13 : index
    %c0_23 = arith.constant 0 : index
    %23 = vector.load %arg10[%c13, %c0_23] : memref<16x32xf32, #tpu.memory_space<vmem>>, vector<1x32xf32>
    tpu.vector_store %arg10[%c13, %c0_23], %21 {strides = array<i32>} : memref<16x32xf32, #tpu.memory_space<vmem>>, vector<1x32xf32>,
    %c0_24 = arith.constant 0 : index
    %c2_25 = arith.constant 2 : index
    %24 = memref.load %arg0[%c0_24, %c2_25] : memref<2x8xi32, #tpu.memory_space<smem>>
    %25 = arith.index_cast %24 : i32 to index
    %c0_26 = arith.constant 0 : index
    %c0_27 = arith.constant 0 : index
    %26 = vector.load %arg1[%25, %c0_26, %c0_27] : memref<50x1x32xf32, #tpu.memory_space<vmem>>, vector<1x1x32xf32>
    %27 = vector.shape_cast %26 : vector<1x1x32xf32> to vector<1x32xf32>
    %c4 = arith.constant 4 : index
    %c0_28 = arith.constant 0 : index
    %28 = vector.load %arg9[%c4, %c0_28] : memref<16x32xf32, #tpu.memory_space<vmem>>, vector<1x32xf32>
    tpu.vector_store %arg9[%c4, %c0_28], %27 {strides = array<i32>} : memref<16x32xf32, #tpu.memory_space<vmem>>, vector<1x32xf32>,
    %c10 = arith.constant 10 : index
    %c0_29 = arith.constant 0 : index
    %29 = vector.load %arg10[%c10, %c0_29] : memref<16x32xf32, #tpu.memory_space<vmem>>, vector<1x32xf32>
    tpu.vector_store %arg10[%c10, %c0_29], %27 {strides = array<i32>} : memref<16x32xf32, #tpu.memory_space<vmem>>, vector<1x32xf32>,
    %c1_30 = arith.constant 1 : index
    %c2_31 = arith.constant 2 : index
    %30 = memref.load %arg0[%c1_30, %c2_31] : memref<2x8xi32, #tpu.memory_space<smem>>
    %31 = arith.index_cast %30 : i32 to index
    %c0_32 = arith.constant 0 : index
    %c0_33 = arith.constant 0 : index
    %32 = vector.load %arg1[%31, %c0_32, %c0_33] : memref<50x1x32xf32, #tpu.memory_space<vmem>>, vector<1x1x32xf32>
    %33 = vector.shape_cast %32 : vector<1x1x32xf32> to vector<1x32xf32>
    %c5 = arith.constant 5 : index
    %c0_34 = arith.constant 0 : index
    %34 = vector.load %arg9[%c5, %c0_34] : memref<16x32xf32, #tpu.memory_space<vmem>>, vector<1x32xf32>
    tpu.vector_store %arg9[%c5, %c0_34], %33 {strides = array<i32>} : memref<16x32xf32, #tpu.memory_space<vmem>>, vector<1x32xf32>,
    %c11 = arith.constant 11 : index
    %c0_35 = arith.constant 0 : index
    %35 = vector.load %arg10[%c11, %c0_35] : memref<16x32xf32, #tpu.memory_space<vmem>>, vector<1x32xf32>
    tpu.vector_store %arg10[%c11, %c0_35], %33 {strides = array<i32>} : memref<16x32xf32, #tpu.memory_space<vmem>>, vector<1x32xf32>,
    %c0_36 = arith.constant 0 : index
    %c3_37 = arith.constant 3 : index
    %36 = memref.load %arg0[%c0_36, %c3_37] : memref<2x8xi32, #tpu.memory_space<smem>>
    %37 = arith.index_cast %36 : i32 to index
    %c0_38 = arith.constant 0 : index
    %c0_39 = arith.constant 0 : index
    %38 = vector.load %arg1[%37, %c0_38, %c0_39] : memref<50x1x32xf32, #tpu.memory_space<vmem>>, vector<1x1x32xf32>
    %39 = vector.shape_cast %38 : vector<1x1x32xf32> to vector<1x32xf32>
    %c6 = arith.constant 6 : index
    %c0_40 = arith.constant 0 : index
    %40 = vector.load %arg9[%c6, %c0_40] : memref<16x32xf32, #tpu.memory_space<vmem>>, vector<1x32xf32>
    tpu.vector_store %arg9[%c6, %c0_40], %39 {strides = array<i32>} : memref<16x32xf32, #tpu.memory_space<vmem>>, vector<1x32xf32>,
    %c8 = arith.constant 8 : index
    %c0_41 = arith.constant 0 : index
    %41 = vector.load %arg10[%c8, %c0_41] : memref<16x32xf32, #tpu.memory_space<vmem>>, vector<1x32xf32>
    tpu.vector_store %arg10[%c8, %c0_41], %39 {strides = array<i32>} : memref<16x32xf32, #tpu.memory_space<vmem>>, vector<1x32xf32>,
    %c1_42 = arith.constant 1 : index
    %c3_43 = arith.constant 3 : index
    %42 = memref.load %arg0[%c1_42, %c3_43] : memref<2x8xi32, #tpu.memory_space<smem>>
    %43 = arith.index_cast %42 : i32 to index
    %c0_44 = arith.constant 0 : index
    %c0_45 = arith.constant 0 : index
    %44 = vector.load %arg1[%43, %c0_44, %c0_45] : memref<50x1x32xf32, #tpu.memory_space<vmem>>, vector<1x1x32xf32>
    %45 = vector.shape_cast %44 : vector<1x1x32xf32> to vector<1x32xf32>
    %c7 = arith.constant 7 : index
    %c0_46 = arith.constant 0 : index
    %46 = vector.load %arg9[%c7, %c0_46] : memref<16x32xf32, #tpu.memory_space<vmem>>, vector<1x32xf32>
    tpu.vector_store %arg9[%c7, %c0_46], %45 {strides = array<i32>} : memref<16x32xf32, #tpu.memory_space<vmem>>, vector<1x32xf32>,
    %c9 = arith.constant 9 : index
    %c0_47 = arith.constant 0 : index
    %47 = vector.load %arg10[%c9, %c0_47] : memref<16x32xf32, #tpu.memory_space<vmem>>, vector<1x32xf32>
    tpu.vector_store %arg10[%c9, %c0_47], %45 {strides = array<i32>} : memref<16x32xf32, #tpu.memory_space<vmem>>, vector<1x32xf32>,
    %c0_48 = arith.constant 0 : index
    %c4_49 = arith.constant 4 : index
    %48 = memref.load %arg0[%c0_48, %c4_49] : memref<2x8xi32, #tpu.memory_space<smem>>
    %49 = arith.index_cast %48 : i32 to index
    %c0_50 = arith.constant 0 : index
    %c0_51 = arith.constant 0 : index
    %50 = vector.load %arg1[%49, %c0_50, %c0_51] : memref<50x1x32xf32, #tpu.memory_space<vmem>>, vector<1x1x32xf32>
    %51 = vector.shape_cast %50 : vector<1x1x32xf32> to vector<1x32xf32>
    %c8_52 = arith.constant 8 : index
    %c0_53 = arith.constant 0 : index
    %52 = vector.load %arg9[%c8_52, %c0_53] : memref<16x32xf32, #tpu.memory_space<vmem>>, vector<1x32xf32>
    tpu.vector_store %arg9[%c8_52, %c0_53], %51 {strides = array<i32>} : memref<16x32xf32, #tpu.memory_space<vmem>>, vector<1x32xf32>,
    %c6_54 = arith.constant 6 : index
    %c0_55 = arith.constant 0 : index
    %53 = vector.load %arg10[%c6_54, %c0_55] : memref<16x32xf32, #tpu.memory_space<vmem>>, vector<1x32xf32>
    tpu.vector_store %arg10[%c6_54, %c0_55], %51 {strides = array<i32>} : memref<16x32xf32, #tpu.memory_space<vmem>>, vector<1x32xf32>,
    %c1_56 = arith.constant 1 : index
    %c4_57 = arith.constant 4 : index
    %54 = memref.load %arg0[%c1_56, %c4_57] : memref<2x8xi32, #tpu.memory_space<smem>>
    %55 = arith.index_cast %54 : i32 to index
    %c0_58 = arith.constant 0 : index
    %c0_59 = arith.constant 0 : index
    %56 = vector.load %arg1[%55, %c0_58, %c0_59] : memref<50x1x32xf32, #tpu.memory_space<vmem>>, vector<1x1x32xf32>
    %57 = vector.shape_cast %56 : vector<1x1x32xf32> to vector<1x32xf32>
    %c9_60 = arith.constant 9 : index
    %c0_61 = arith.constant 0 : index
    %58 = vector.load %arg9[%c9_60, %c0_61] : memref<16x32xf32, #tpu.memory_space<vmem>>, vector<1x32xf32>
    tpu.vector_store %arg9[%c9_60, %c0_61], %57 {strides = array<i32>} : memref<16x32xf32, #tpu.memory_space<vmem>>, vector<1x32xf32>,
    %c7_62 = arith.constant 7 : index
    %c0_63 = arith.constant 0 : index
    %59 = vector.load %arg10[%c7_62, %c0_63] : memref<16x32xf32, #tpu.memory_space<vmem>>, vector<1x32xf32>
    tpu.vector_store %arg10[%c7_62, %c0_63], %57 {strides = array<i32>} : memref<16x32xf32, #tpu.memory_space<vmem>>, vector<1x32xf32>,
    %c0_64 = arith.constant 0 : index
    %c5_65 = arith.constant 5 : index
    %60 = memref.load %arg0[%c0_64, %c5_65] : memref<2x8xi32, #tpu.memory_space<smem>>
    %61 = arith.index_cast %60 : i32 to index
    %c0_66 = arith.constant 0 : index
    %c0_67 = arith.constant 0 : index
    %62 = vector.load %arg1[%61, %c0_66, %c0_67] : memref<50x1x32xf32, #tpu.memory_space<vmem>>, vector<1x1x32xf32>
    %63 = vector.shape_cast %62 : vector<1x1x32xf32> to vector<1x32xf32>
    %c10_68 = arith.constant 10 : index
    %c0_69 = arith.constant 0 : index
    %64 = vector.load %arg9[%c10_68, %c0_69] : memref<16x32xf32, #tpu.memory_space<vmem>>, vector<1x32xf32>
    tpu.vector_store %arg9[%c10_68, %c0_69], %63 {strides = array<i32>} : memref<16x32xf32, #tpu.memory_space<vmem>>, vector<1x32xf32>,
    %c4_70 = arith.constant 4 : index
    %c0_71 = arith.constant 0 : index
    %65 = vector.load %arg10[%c4_70, %c0_71] : memref<16x32xf32, #tpu.memory_space<vmem>>, vector<1x32xf32>
    tpu.vector_store %arg10[%c4_70, %c0_71], %63 {strides = array<i32>} : memref<16x32xf32, #tpu.memory_space<vmem>>, vector<1x32xf32>,
    %c1_72 = arith.constant 1 : index
    %c5_73 = arith.constant 5 : index
    %66 = memref.load %arg0[%c1_72, %c5_73] : memref<2x8xi32, #tpu.memory_space<smem>>
    %67 = arith.index_cast %66 : i32 to index
    %c0_74 = arith.constant 0 : index
    %c0_75 = arith.constant 0 : index
    %68 = vector.load %arg1[%67, %c0_74, %c0_75] : memref<50x1x32xf32, #tpu.memory_space<vmem>>, vector<1x1x32xf32>
    %69 = vector.shape_cast %68 : vector<1x1x32xf32> to vector<1x32xf32>
    %c11_76 = arith.constant 11 : index
    %c0_77 = arith.constant 0 : index
    %70 = vector.load %arg9[%c11_76, %c0_77] : memref<16x32xf32, #tpu.memory_space<vmem>>, vector<1x32xf32>
    tpu.vector_store %arg9[%c11_76, %c0_77], %69 {strides = array<i32>} : memref<16x32xf32, #tpu.memory_space<vmem>>, vector<1x32xf32>,
    %c5_78 = arith.constant 5 : index
    %c0_79 = arith.constant 0 : index
    %71 = vector.load %arg10[%c5_78, %c0_79] : memref<16x32xf32, #tpu.memory_space<vmem>>, vector<1x32xf32>
    tpu.vector_store %arg10[%c5_78, %c0_79], %69 {strides = array<i32>} : memref<16x32xf32, #tpu.memory_space<vmem>>, vector<1x32xf32>,
    %c0_80 = arith.constant 0 : index
    %c6_81 = arith.constant 6 : index
    %72 = memref.load %arg0[%c0_80, %c6_81] : memref<2x8xi32, #tpu.memory_space<smem>>
    %73 = arith.index_cast %72 : i32 to index
    %c0_82 = arith.constant 0 : index
    %c0_83 = arith.constant 0 : index
    %74 = vector.load %arg1[%73, %c0_82, %c0_83] : memref<50x1x32xf32, #tpu.memory_space<vmem>>, vector<1x1x32xf32>
    %75 = vector.shape_cast %74 : vector<1x1x32xf32> to vector<1x32xf32>
    %c12_84 = arith.constant 12 : index
    %c0_85 = arith.constant 0 : index
    %76 = vector.load %arg9[%c12_84, %c0_85] : memref<16x32xf32, #tpu.memory_space<vmem>>, vector<1x32xf32>
    tpu.vector_store %arg9[%c12_84, %c0_85], %75 {strides = array<i32>} : memref<16x32xf32, #tpu.memory_space<vmem>>, vector<1x32xf32>,
    %c2_86 = arith.constant 2 : index
    %c0_87 = arith.constant 0 : index
    %77 = vector.load %arg10[%c2_86, %c0_87] : memref<16x32xf32, #tpu.memory_space<vmem>>, vector<1x32xf32>
    tpu.vector_store %arg10[%c2_86, %c0_87], %75 {strides = array<i32>} : memref<16x32xf32, #tpu.memory_space<vmem>>, vector<1x32xf32>,
    %c1_88 = arith.constant 1 : index
    %c6_89 = arith.constant 6 : index
    %78 = memref.load %arg0[%c1_88, %c6_89] : memref<2x8xi32, #tpu.memory_space<smem>>
    %79 = arith.index_cast %78 : i32 to index
    %c0_90 = arith.constant 0 : index
    %c0_91 = arith.constant 0 : index
    %80 = vector.load %arg1[%79, %c0_90, %c0_91] : memref<50x1x32xf32, #tpu.memory_space<vmem>>, vector<1x1x32xf32>
    %81 = vector.shape_cast %80 : vector<1x1x32xf32> to vector<1x32xf32>
    %c13_92 = arith.constant 13 : index
    %c0_93 = arith.constant 0 : index
    %82 = vector.load %arg9[%c13_92, %c0_93] : memref<16x32xf32, #tpu.memory_space<vmem>>, vector<1x32xf32>
    tpu.vector_store %arg9[%c13_92, %c0_93], %81 {strides = array<i32>} : memref<16x32xf32, #tpu.memory_space<vmem>>, vector<1x32xf32>,
    %c3_94 = arith.constant 3 : index
    %c0_95 = arith.constant 0 : index
    %83 = vector.load %arg10[%c3_94, %c0_95] : memref<16x32xf32, #tpu.memory_space<vmem>>, vector<1x32xf32>
    tpu.vector_store %arg10[%c3_94, %c0_95], %81 {strides = array<i32>} : memref<16x32xf32, #tpu.memory_space<vmem>>, vector<1x32xf32>,
    %c0_96 = arith.constant 0 : index
    %c7_97 = arith.constant 7 : index
    %84 = memref.load %arg0[%c0_96, %c7_97] : memref<2x8xi32, #tpu.memory_space<smem>>
    %85 = arith.index_cast %84 : i32 to index
    %c0_98 = arith.constant 0 : index
    %c0_99 = arith.constant 0 : index
    %86 = vector.load %arg1[%85, %c0_98, %c0_99] : memref<50x1x32xf32, #tpu.memory_space<vmem>>, vector<1x1x32xf32>
    %87 = vector.shape_cast %86 : vector<1x1x32xf32> to vector<1x32xf32>
    %c14_100 = arith.constant 14 : index
    %c0_101 = arith.constant 0 : index
    %88 = vector.load %arg9[%c14_100, %c0_101] : memref<16x32xf32, #tpu.memory_space<vmem>>, vector<1x32xf32>
    tpu.vector_store %arg9[%c14_100, %c0_101], %87 {strides = array<i32>} : memref<16x32xf32, #tpu.memory_space<vmem>>, vector<1x32xf32>,
    %c0_102 = arith.constant 0 : index
    %c0_103 = arith.constant 0 : index
    %89 = vector.load %arg10[%c0_102, %c0_103] : memref<16x32xf32, #tpu.memory_space<vmem>>, vector<1x32xf32>
    tpu.vector_store %arg10[%c0_102, %c0_103], %87 {strides = array<i32>} : memref<16x32xf32, #tpu.memory_space<vmem>>, vector<1x32xf32>,
    %c1_104 = arith.constant 1 : index
    %c7_105 = arith.constant 7 : index
    %90 = memref.load %arg0[%c1_104, %c7_105] : memref<2x8xi32, #tpu.memory_space<smem>>
    %91 = arith.index_cast %90 : i32 to index
    %c0_106 = arith.constant 0 : index
    %c0_107 = arith.constant 0 : index
    %92 = vector.load %arg1[%91, %c0_106, %c0_107] : memref<50x1x32xf32, #tpu.memory_space<vmem>>, vector<1x1x32xf32>
    %93 = vector.shape_cast %92 : vector<1x1x32xf32> to vector<1x32xf32>
    %c15_108 = arith.constant 15 : index
    %c0_109 = arith.constant 0 : index
    %94 = vector.load %arg9[%c15_108, %c0_109] : memref<16x32xf32, #tpu.memory_space<vmem>>, vector<1x32xf32>
    tpu.vector_store %arg9[%c15_108, %c0_109], %93 {strides = array<i32>} : memref<16x32xf32, #tpu.memory_space<vmem>>, vector<1x32xf32>,
    %c1_110 = arith.constant 1 : index
    %c0_111 = arith.constant 0 : index
    %95 = vector.load %arg10[%c1_110, %c0_111] : memref<16x32xf32, #tpu.memory_space<vmem>>, vector<1x32xf32>
    tpu.vector_store %arg10[%c1_110, %c0_111], %93 {strides = array<i32>} : memref<16x32xf32, #tpu.memory_space<vmem>>, vector<1x32xf32>,
    %c0_112 = arith.constant 0 : index
    %c0_113 = arith.constant 0 : index
    %96 = vector.load %arg9[%c0_112, %c0_113] : memref<16x32xf32, #tpu.memory_space<vmem>>, vector<16x32xf32>
    %c0_114 = arith.constant 0 : index
    %c0_115 = arith.constant 0 : index
    %97 = vector.load %arg2[%c0_114, %c0_115] : memref<32x16xf32, #tpu.memory_space<vmem>>, vector<32x16xf32>
    %cst = arith.constant dense<0.000000e+00> : vector<16x16xf32>
    %98 = tpu.matmul %96, %97, %cst {dimension_numbers = #tpu.dot_dimension_numbers<[1], [0], [0], [1], [0, 0, 1, 1], [], []>} : vector<16x32xf32>, vector<32x16xf32>, vector<16x16xf32> -> vector<16x16xf32>
    %c0_116 = arith.constant 0 : index
    %c0_117 = arith.constant 0 : index
    %99 = vector.load %arg10[%c0_116, %c0_117] : memref<16x32xf32, #tpu.memory_space<vmem>>, vector<16x32xf32>
    %c0_118 = arith.constant 0 : index
    %c0_119 = arith.constant 0 : index
    %100 = vector.load %arg3[%c0_118, %c0_119] : memref<32x16xf32, #tpu.memory_space<vmem>>, vector<32x16xf32>
    %cst_120 = arith.constant dense<0.000000e+00> : vector<16x16xf32>
    %101 = tpu.matmul %99, %100, %cst_120 {dimension_numbers = #tpu.dot_dimension_numbers<[1], [0], [0], [1], [0, 0, 1, 1], [], []>} : vector<16x32xf32>, vector<32x16xf32>, vector<16x16xf32> -> vector<16x16xf32>
    %102 = tpu.concatenate %98, %101 in 1 : vector<16x16xf32>, vector<16x16xf32> -> vector<16x32xf32>
    %c0_121 = arith.constant 0 : index
    %c0_122 = arith.constant 0 : index
    %103 = vector.load %arg5[%c0_121, %c0_122] : memref<1x32xf32, #tpu.memory_space<vmem>>, vector<1x32xf32>
    %104 = vector.broadcast %103 : vector<1x32xf32> to vector<16x32xf32>
    %105 = arith.addf %102, %104 : vector<16x32xf32>
    %c0_123 = arith.constant 0 : index
    %c0_124 = arith.constant 0 : index
    %106 = vector.load %arg4[%c0_123, %c0_124] : memref<32x32xf32, #tpu.memory_space<vmem>>, vector<32x32xf32>
    %cst_125 = arith.constant 0.000000e+00 : f32
    %107 = vector.broadcast %cst_125 : f32 to vector<2x32xf32>
    %cst_126 = arith.constant 0.000000e+00 : f32
    %108 = vector.broadcast %cst_126 : f32 to vector<2x32xf32>
    %109 = vector.extract_strided_slice %105 {offsets = [0, 0], sizes = [2, 32], strides = [1, 1]} : vector<16x32xf32> to vector<2x32xf32>
    %cst_127 = arith.constant dense<0.000000e+00> : vector<2x32xf32>
    %110 = tpu.matmul %107, %106, %cst_127 {dimension_numbers = #tpu.dot_dimension_numbers<[1], [0], [0], [1], [0, 0, 1, 1], [], []>} : vector<2x32xf32>, vector<32x32xf32>, vector<2x32xf32> -> vector<2x32xf32>
    %111 = arith.addf %109, %110 : vector<2x32xf32>
    %cst_128 = arith.constant 0.000000e+00 : f32
    %112 = vector.broadcast %cst_128 : f32 to vector<2x32xf32>
    %113 = arith.maximumf %111, %112 : vector<2x32xf32>
    %114 = arith.maximumf %108, %113 : vector<2x32xf32>
    %115 = vector.extract_strided_slice %105 {offsets = [2, 0], sizes = [2, 32], strides = [1, 1]} : vector<16x32xf32> to vector<2x32xf32>
    %cst_129 = arith.constant dense<0.000000e+00> : vector<2x32xf32>
    %116 = tpu.matmul %113, %106, %cst_129 {dimension_numbers = #tpu.dot_dimension_numbers<[1], [0], [0], [1], [0, 0, 1, 1], [], []>} : vector<2x32xf32>, vector<32x32xf32>, vector<2x32xf32> -> vector<2x32xf32>
    %117 = arith.addf %115, %116 : vector<2x32xf32>
    %cst_130 = arith.constant 0.000000e+00 : f32
    %118 = vector.broadcast %cst_130 : f32 to vector<2x32xf32>
    %119 = arith.maximumf %117, %118 : vector<2x32xf32>
    %120 = arith.maximumf %114, %119 : vector<2x32xf32>
    %121 = vector.extract_strided_slice %105 {offsets = [4, 0], sizes = [2, 32], strides = [1, 1]} : vector<16x32xf32> to vector<2x32xf32>
    %cst_131 = arith.constant dense<0.000000e+00> : vector<2x32xf32>
    %122 = tpu.matmul %119, %106, %cst_131 {dimension_numbers = #tpu.dot_dimension_numbers<[1], [0], [0], [1], [0, 0, 1, 1], [], []>} : vector<2x32xf32>, vector<32x32xf32>, vector<2x32xf32> -> vector<2x32xf32>
    %123 = arith.addf %121, %122 : vector<2x32xf32>
    %cst_132 = arith.constant 0.000000e+00 : f32
    %124 = vector.broadcast %cst_132 : f32 to vector<2x32xf32>
    %125 = arith.maximumf %123, %124 : vector<2x32xf32>
    %126 = arith.maximumf %120, %125 : vector<2x32xf32>
    %127 = vector.extract_strided_slice %105 {offsets = [6, 0], sizes = [2, 32], strides = [1, 1]} : vector<16x32xf32> to vector<2x32xf32>
    %cst_133 = arith.constant dense<0.000000e+00> : vector<2x32xf32>
    %128 = tpu.matmul %125, %106, %cst_133 {dimension_numbers = #tpu.dot_dimension_numbers<[1], [0], [0], [1], [0, 0, 1, 1], [], []>} : vector<2x32xf32>, vector<32x32xf32>, vector<2x32xf32> -> vector<2x32xf32>
    %129 = arith.addf %127, %128 : vector<2x32xf32>
    %cst_134 = arith.constant 0.000000e+00 : f32
    %130 = vector.broadcast %cst_134 : f32 to vector<2x32xf32>
    %131 = arith.maximumf %129, %130 : vector<2x32xf32>
    %132 = arith.maximumf %126, %131 : vector<2x32xf32>
    %133 = vector.extract_strided_slice %105 {offsets = [8, 0], sizes = [2, 32], strides = [1, 1]} : vector<16x32xf32> to vector<2x32xf32>
    %cst_135 = arith.constant dense<0.000000e+00> : vector<2x32xf32>
    %134 = tpu.matmul %131, %106, %cst_135 {dimension_numbers = #tpu.dot_dimension_numbers<[1], [0], [0], [1], [0, 0, 1, 1], [], []>} : vector<2x32xf32>, vector<32x32xf32>, vector<2x32xf32> -> vector<2x32xf32>
    %135 = arith.addf %133, %134 : vector<2x32xf32>
    %cst_136 = arith.constant 0.000000e+00 : f32
    %136 = vector.broadcast %cst_136 : f32 to vector<2x32xf32>
    %137 = arith.maximumf %135, %136 : vector<2x32xf32>
    %138 = arith.maximumf %132, %137 : vector<2x32xf32>
    %139 = vector.extract_strided_slice %105 {offsets = [10, 0], sizes = [2, 32], strides = [1, 1]} : vector<16x32xf32> to vector<2x32xf32>
    %cst_137 = arith.constant dense<0.000000e+00> : vector<2x32xf32>
    %140 = tpu.matmul %137, %106, %cst_137 {dimension_numbers = #tpu.dot_dimension_numbers<[1], [0], [0], [1], [0, 0, 1, 1], [], []>} : vector<2x32xf32>, vector<32x32xf32>, vector<2x32xf32> -> vector<2x32xf32>
    %141 = arith.addf %139, %140 : vector<2x32xf32>
    %cst_138 = arith.constant 0.000000e+00 : f32
    %142 = vector.broadcast %cst_138 : f32 to vector<2x32xf32>
    %143 = arith.maximumf %141, %142 : vector<2x32xf32>
    %144 = arith.maximumf %138, %143 : vector<2x32xf32>
    %145 = vector.extract_strided_slice %105 {offsets = [12, 0], sizes = [2, 32], strides = [1, 1]} : vector<16x32xf32> to vector<2x32xf32>
    %cst_139 = arith.constant dense<0.000000e+00> : vector<2x32xf32>
    %146 = tpu.matmul %143, %106, %cst_139 {dimension_numbers = #tpu.dot_dimension_numbers<[1], [0], [0], [1], [0, 0, 1, 1], [], []>} : vector<2x32xf32>, vector<32x32xf32>, vector<2x32xf32> -> vector<2x32xf32>
    %147 = arith.addf %145, %146 : vector<2x32xf32>
    %cst_140 = arith.constant 0.000000e+00 : f32
    %148 = vector.broadcast %cst_140 : f32 to vector<2x32xf32>
    %149 = arith.maximumf %147, %148 : vector<2x32xf32>
    %150 = arith.maximumf %144, %149 : vector<2x32xf32>
    %151 = vector.extract_strided_slice %105 {offsets = [14, 0], sizes = [2, 32], strides = [1, 1]} : vector<16x32xf32> to vector<2x32xf32>
    %cst_141 = arith.constant dense<0.000000e+00> : vector<2x32xf32>
    %152 = tpu.matmul %149, %106, %cst_141 {dimension_numbers = #tpu.dot_dimension_numbers<[1], [0], [0], [1], [0, 0, 1, 1], [], []>} : vector<2x32xf32>, vector<32x32xf32>, vector<2x32xf32> -> vector<2x32xf32>
    %153 = arith.addf %151, %152 : vector<2x32xf32>
    %cst_142 = arith.constant 0.000000e+00 : f32
    %154 = vector.broadcast %cst_142 : f32 to vector<2x32xf32>
    %155 = arith.maximumf %153, %154 : vector<2x32xf32>
    %156 = arith.maximumf %150, %155 : vector<2x32xf32>
    %157 = math.tanh %156 : vector<2x32xf32>
    %c0_143 = arith.constant 0 : index
    %c0_144 = arith.constant 0 : index
    %158 = vector.load %arg6[%c0_143, %c0_144] : memref<32x10xf32, #tpu.memory_space<vmem>>, vector<32x10xf32>
    %cst_145 = arith.constant dense<0.000000e+00> : vector<2x10xf32>
    %159 = tpu.matmul %157, %158, %cst_145 {dimension_numbers = #tpu.dot_dimension_numbers<[1], [0], [0], [1], [0, 0, 1, 1], [], []>} : vector<2x32xf32>, vector<32x10xf32>, vector<2x10xf32> -> vector<2x10xf32>
    %c0_146 = arith.constant 0 : index
    %c0_147 = arith.constant 0 : index
    %160 = vector.load %arg7[%c0_146, %c0_147] : memref<1x10xf32, #tpu.memory_space<vmem>>, vector<1x10xf32>
    %161 = vector.broadcast %160 : vector<1x10xf32> to vector<2x10xf32>
    %162 = arith.addf %159, %161 : vector<2x10xf32>
    %c0_148 = arith.constant 0 : index
    %c0_149 = arith.constant 0 : index
    %163 = vector.load %arg8[%c0_148, %c0_149] : memref<2x10xf32, #tpu.memory_space<vmem>>, vector<2x10xf32>
    tpu.vector_store %arg8[%c0_148, %c0_149], %162 {strides = array<i32>} : memref<2x10xf32, #tpu.memory_space<vmem>>, vector<2x10xf32>,
    return
  }
}

</mosaic_0001>

<llo_original>
// kernel: rrn_forward.1
$region0: #{rrn_forward.1}
  #allocation0 [shape = 'u32[]', space=smem, size = 0x4, offset = 0x4, fixed_abs, tag = 'smem constant byte address 0x4 - core index']
  #allocation1 [shape = 'u32[144,128]{1,0:T(1,128)}', space=vmem, size = 0x12000, scoped, tag = 'internal scratch']
  #allocation2 [shape = 'f32[16,32]{1,0:T(8,128)}', space=vmem, size = 0x2000, scoped, tag = 'scratch operand']
  #allocation3 [shape = 'f32[16,32]{1,0:T(8,128)}', space=vmem, size = 0x2000, scoped, tag = 'scratch operand']
  %s0 = inlined_call_operand.vmem [shape: s32[2,8], index: 0, kind: input, shape index: {}]
  %s1 = inlined_call_operand.vmem [shape: f32[50,1,32], index: 1, kind: input, shape index: {}]
  %s2 = inlined_call_operand.vmem [shape: f32[32,16], index: 2, kind: input, shape index: {}]
  %s3 = inlined_call_operand.vmem [shape: f32[32,16], index: 3, kind: input, shape index: {}]
  %s4 = inlined_call_operand.vmem [shape: f32[32,32], index: 4, kind: input, shape index: {}]
  %s5 = inlined_call_operand.vmem [shape: f32[1,32], index: 5, kind: input, shape index: {}]
  %s6 = inlined_call_operand.vmem [shape: f32[32,10], index: 6, kind: input, shape index: {}]
  %s7 = inlined_call_operand.vmem [shape: f32[1,10], index: 7, kind: input, shape index: {}]
  %s8 = inlined_call_operand.hbm [shape: f32[2,10], index: 8, kind: output, shape index: {}]
  %s9 = sld [smem:[#allocation0]]
  $region46: #{rrn_forward.1} parent=0
    _
  %s11 = ssub.s32 1, %s9
  %s12 = scalar_select 0, %s11, %s9
  $region1: #{rrn_forward.1} parent=0
    #allocation4 [shape = 'u8[1024]{0}', space=smem, size = 0x400, scoped, tag = 'input window, operand 0, single buffered']
    #allocation5 [shape = 's32[1]{0}', space=sflag, size = 0x4, scoped, tag = 'scoped memory for rrn_forward.1']
    #allocation6 [shape = 's32[1]{0}', space=sflag, size = 0x4, scoped, tag = 'scoped memory for rrn_forward.1']
    #allocation7 [shape = 'u8[1024]{0}', space=vmem, size = 0x400, scoped, tag = 'output window, operand 0, single buffered']
    %13 = vsyncpa [#allocation6], 0
    %14 = vsyncpa [#allocation5], 0
    // Predicated region
    $region2: #{rrn_forward.1} parent=1 // pred_check
      _
    $region3: #{rrn_forward.1} parent=1 // pred_check_branch
      %16 = sbr.rel (0) target = $region5
    $region4: #{rrn_forward.1} parent=1 // pred_region
      %s18 = ssub.s32 32, 32
      %19 = vsyncadd [#allocation6], %s18
      %s21 = sshll.u32 %s0, 4
      %s22 = int_to_ptr.vmem [resolvable:$true] %s21
      %24 = dma.vmem_to_smem %s22, 32, [#allocation4], [#allocation6]
    $region5: #{rrn_forward.1} parent=1 // pred_fallthru
      _
    // Predicated region
    $region6: #{rrn_forward.1} parent=1 // pred_check
      _
    $region7: #{rrn_forward.1} parent=1 // pred_check_branch
      %26 = sbr.rel (0) target = $region9
    $region8: #{rrn_forward.1} parent=1 // pred_region
      _
    $region9: #{rrn_forward.1} parent=1 // pred_fallthru
      _
    // Predicated region
    $region10: #{rrn_forward.1} parent=1 // pred_check
      _
    $region11: #{rrn_forward.1} parent=1 // pred_check_branch
      %28 = sbr.rel (0) target = $region13
    $region12: #{rrn_forward.1} parent=1 // pred_region
      _
    $region13: #{rrn_forward.1} parent=1 // pred_fallthru
      _
    // Predicated region
    $region14: #{rrn_forward.1} parent=1 // pred_check
      _
    $region15: #{rrn_forward.1} parent=1 // pred_check_branch
      %30 = sbr.rel (0) target = $region17
    $region16: #{rrn_forward.1} parent=1 // pred_region
      _
    $region17: #{rrn_forward.1} parent=1 // pred_fallthru
      _
    // Predicated region
    $region18: #{rrn_forward.1} parent=1 // pred_check
      _
    $region19: #{rrn_forward.1} parent=1 // pred_check_branch
      %32 = sbr.rel (0) target = $region21
    $region20: #{rrn_forward.1} parent=1 // pred_region
      _
    $region21: #{rrn_forward.1} parent=1 // pred_fallthru
      _
    // Predicated region
    $region22: #{rrn_forward.1} parent=1 // pred_check
      _
    $region23: #{rrn_forward.1} parent=1 // pred_check_branch
      %34 = sbr.rel (0) target = $region25
    $region24: #{rrn_forward.1} parent=1 // pred_region
      _
    $region25: #{rrn_forward.1} parent=1 // pred_fallthru
      _
    // Predicated region
    $region26: #{rrn_forward.1} parent=1 // pred_check
      _
    $region27: #{rrn_forward.1} parent=1 // pred_check_branch
      %36 = sbr.rel (0) target = $region29
    $region28: #{rrn_forward.1} parent=1 // pred_region
      _
    $region29: #{rrn_forward.1} parent=1 // pred_fallthru
      _
    // Predicated region
    $region30: #{rrn_forward.1} parent=1 // pred_check
      _
    $region31: #{rrn_forward.1} parent=1 // pred_check_branch
      %38 = sbr.rel (0) target = $region33
    $region32: #{rrn_forward.1} parent=1 // pred_region
      _
    $region33: #{rrn_forward.1} parent=1 // pred_fallthru
      _
    // Predicated region
    $region34: #{rrn_forward.1} parent=1 // pred_check
      _
    $region35: #{rrn_forward.1} parent=1 // pred_check_branch
      %40 = sbr.rel (0) target = $region37
    $region36: #{rrn_forward.1} parent=1 // pred_region
      %41 = dma.done [#allocation6], 32
    $region37: #{rrn_forward.1} parent=1 // pred_fallthru
      _
    %42 = sfence
    %s43 = sld [smem:[#allocation4]]
    %s44 = scalar_lea.vmem %s1, %s43
    %v45 = vld [vmem:[%s44] sm:$0x1]
    %vm46 = vcmask 253952
    %47 = vst.msk [vmem:[#allocation2] sm:$0x1] %vm46, %v45
    %48 = vst.msk [vmem:[#allocation3 + $0xe] sm:$0x1] %vm46, %v45
    %s49 = sld [smem:[#allocation4 + $0x80]]
    %s50 = scalar_lea.vmem %s1, %s49
    %v51 = vld [vmem:[%s50] sm:$0x1]
    %52 = vst.msk [vmem:[#allocation2 + $0x1] sm:$0x1] %vm46, %v51
    %53 = vst.msk [vmem:[#allocation3 + $0xf] sm:$0x1] %vm46, %v51
    %s54 = sld [smem:[#allocation4 + $0x1]]
    %s55 = scalar_lea.vmem %s1, %s54
    %v56 = vld [vmem:[%s55] sm:$0x1]
    %57 = vst.msk [vmem:[#allocation2 + $0x2] sm:$0x1] %vm46, %v56
    %58 = vst.msk [vmem:[#allocation3 + $0xc] sm:$0x1] %vm46, %v56
    %s59 = sld [smem:[#allocation4 + $0x81]]
    %s60 = scalar_lea.vmem %s1, %s59
    %v61 = vld [vmem:[%s60] sm:$0x1]
    %62 = vst.msk [vmem:[#allocation2 + $0x3] sm:$0x1] %vm46, %v61
    %63 = vst.msk [vmem:[#allocation3 + $0xd] sm:$0x1] %vm46, %v61
    %s64 = sld [smem:[#allocation4 + $0x2]]
    %s65 = scalar_lea.vmem %s1, %s64
    %v66 = vld [vmem:[%s65] sm:$0x1]
    %67 = vst.msk [vmem:[#allocation2 + $0x4] sm:$0x1] %vm46, %v66
    %68 = vst.msk [vmem:[#allocation3 + $0xa] sm:$0x1] %vm46, %v66
    %s69 = sld [smem:[#allocation4 + $0x82]]
    %s70 = scalar_lea.vmem %s1, %s69
    %v71 = vld [vmem:[%s70] sm:$0x1]
    %72 = vst.msk [vmem:[#allocation2 + $0x5] sm:$0x1] %vm46, %v71
    %73 = vst.msk [vmem:[#allocation3 + $0xb] sm:$0x1] %vm46, %v71
    %s74 = sld [smem:[#allocation4 + $0x3]]
    %s75 = scalar_lea.vmem %s1, %s74
    %v76 = vld [vmem:[%s75] sm:$0x1]
    %77 = vst.msk [vmem:[#allocation2 + $0x6] sm:$0x1] %vm46, %v76
    %78 = vst.msk [vmem:[#allocation3 + $0x8] sm:$0x1] %vm46, %v76
    %s79 = sld [smem:[#allocation4 + $0x83]]
    %s80 = scalar_lea.vmem %s1, %s79
    %v81 = vld [vmem:[%s80] sm:$0x1]
    %82 = vst.msk [vmem:[#allocation2 + $0x7] sm:$0x1] %vm46, %v81
    %83 = vst.msk [vmem:[#allocation3 + $0x9] sm:$0x1] %vm46, %v81
    %s84 = sld [smem:[#allocation4 + $0x4]]
    %s85 = scalar_lea.vmem %s1, %s84
    %v86 = vld [vmem:[%s85] sm:$0x1]
    %87 = vst.msk [vmem:[#allocation2 + $0x8] sm:$0x1] %vm46, %v86
    %88 = vst.msk [vmem:[#allocation3 + $0x6] sm:$0x1] %vm46, %v86
    %s89 = sld [smem:[#allocation4 + $0x84]]
    %s90 = scalar_lea.vmem %s1, %s89
    %v91 = vld [vmem:[%s90] sm:$0x1]
    %92 = vst.msk [vmem:[#allocation2 + $0x9] sm:$0x1] %vm46, %v91
    %93 = vst.msk [vmem:[#allocation3 + $0x7] sm:$0x1] %vm46, %v91
    %s94 = sld [smem:[#allocation4 + $0x5]]
    %s95 = scalar_lea.vmem %s1, %s94
    %v96 = vld [vmem:[%s95] sm:$0x1]
    %97 = vst.msk [vmem:[#allocation2 + $0xa] sm:$0x1] %vm46, %v96
    %98 = vst.msk [vmem:[#allocation3 + $0x4] sm:$0x1] %vm46, %v96
    %s99 = sld [smem:[#allocation4 + $0x85]]
    %s100 = scalar_lea.vmem %s1, %s99
    %v101 = vld [vmem:[%s100] sm:$0x1]
    %102 = vst.msk [vmem:[#allocation2 + $0xb] sm:$0x1] %vm46, %v101
    %103 = vst.msk [vmem:[#allocation3 + $0x5] sm:$0x1] %vm46, %v101
    %s104 = sld [smem:[#allocation4 + $0x6]]
    %s105 = scalar_lea.vmem %s1, %s104
    %v106 = vld [vmem:[%s105] sm:$0x1]
    %107 = vst.msk [vmem:[#allocation2 + $0xc] sm:$0x1] %vm46, %v106
    %108 = vst.msk [vmem:[#allocation3 + $0x2] sm:$0x1] %vm46, %v106
    %s109 = sld [smem:[#allocation4 + $0x86]]
    %s110 = scalar_lea.vmem %s1, %s109
    %v111 = vld [vmem:[%s110] sm:$0x1]
    %112 = vst.msk [vmem:[#allocation2 + $0xd] sm:$0x1] %vm46, %v111
    %113 = vst.msk [vmem:[#allocation3 + $0x3] sm:$0x1] %vm46, %v111
    %s114 = sld [smem:[#allocation4 + $0x7]]
    %s115 = scalar_lea.vmem %s1, %s114
    %v116 = vld [vmem:[%s115] sm:$0x1]
    %117 = vst.msk [vmem:[#allocation2 + $0xe] sm:$0x1] %vm46, %v116
    %118 = vst.msk [vmem:[#allocation3] sm:$0x1] %vm46, %v116
    %s119 = sld [smem:[#allocation4 + $0x87]]
    %s120 = scalar_lea.vmem %s1, %s119
    %v121 = vld [vmem:[%s120] sm:$0x1]
    %122 = vst.msk [vmem:[#allocation2 + $0xf] sm:$0x1] %vm46, %v121
    %123 = vst.msk [vmem:[#allocation3 + $0x1] sm:$0x1] %vm46, %v121
    %v124 = vld [vmem:[#allocation2] sm:$0xff]
    %v125 = vld [vmem:[#allocation2 + $0x8] sm:$0xff]
    %v126 = vld [vmem:[%s2] sm:$0xff]
    %v127 = vld [vmem:[%s2 + $0x8] sm:$0xff]
    %v128 = vld [vmem:[%s2 + $0x10] sm:$0xff]
    %v129 = vld [vmem:[%s2 + $0x18] sm:$0xff]
    %vm130 = vcmask 261120
    %v132 = vsel %vm130, %v124, 0
    %v135 = vsel %vm130, %v125, 0
    %137 = vmatprep.subr.mxu0 0.0
    %138 = vmatpush1.msra.mxu0 0.0
    %139 = vmatprep.subr.mxu0 0.0
    %140 = vmatpush1.msra.mxu0 0.0
    %141 = vmatprep.subr.mxu0 0.0
    %142 = vmatpush1.msra.mxu0 0.0
    %143 = vmatprep.subr.mxu0 0.0
    %144 = vmatpush1.msra.mxu0 0.0
    %145 = vmatprep.subr.mxu0 0.0
    %146 = vmatpush1.msra.mxu0 0.0
    %147 = vmatprep.subr.mxu0 0.0
    %148 = vmatpush1.msra.mxu0 0.0
    %149 = vmatprep.subr.mxu0 0.0
    %150 = vmatpush1.msra.mxu0 0.0
    %151 = vmatprep.subr.mxu0 0.0
    %152 = vmatpush1.msra.mxu0 0.0
    %153 = vmatprep.subr.mxu0 0.0
    %154 = vmatpush1.msra.mxu0 0.0
    %155 = vmatprep.subr.mxu0 0.0
    %156 = vmatpush1.msra.mxu0 0.0
    %157 = vmatprep.subr.mxu0 0.0
    %158 = vmatpush1.msra.mxu0 0.0
    %159 = vmatprep.subr.mxu0 0.0
    %160 = vmatpush1.msra.mxu0 0.0
    %161 = vmatprep.subr.mxu0 0.0
    %162 = vmatpush1.msra.mxu0 %v129
    %163 = vmatprep.subr.mxu0 0.0
    %164 = vmatpush1.msra.mxu0 %v128
    %165 = vmatprep.subr.mxu0 0.0
    %166 = vmatpush1.msra.mxu0 %v127
    %167 = vmatprep.subr.mxu0 0.0
    %168 = vmatpush1.msra.mxu0 %v126
    %169 = vmatprep.subr.mxu0 0.0
    %170 = vmatpush2.msra.mxu0 0.0
    %171 = vmatprep.subr.mxu0 0.0
    %172 = vmatpush2.msra.mxu0 0.0
    %173 = vmatprep.subr.mxu0 0.0
    %174 = vmatpush2.msra.mxu0 0.0
    %175 = vmatprep.subr.mxu0 0.0
    %176 = vmatpush2.msra.mxu0 0.0
    %177 = vmatprep.subr.mxu0 0.0
    %178 = vmatpush2.msra.mxu0 0.0
    %179 = vmatprep.subr.mxu0 0.0
    %180 = vmatpush2.msra.mxu0 0.0
    %181 = vmatprep.subr.mxu0 0.0
    %182 = vmatpush2.msra.mxu0 0.0
    %183 = vmatprep.subr.mxu0 0.0
    %184 = vmatpush2.msra.mxu0 0.0
    %185 = vmatprep.subr.mxu0 0.0
    %186 = vmatpush2.msra.mxu0 0.0
    %187 = vmatprep.subr.mxu0 0.0
    %188 = vmatpush2.msra.mxu0 0.0
    %189 = vmatprep.subr.mxu0 0.0
    %190 = vmatpush2.msra.mxu0 0.0
    %191 = vmatprep.subr.mxu0 0.0
    %192 = vmatpush2.msra.mxu0 0.0
    %193 = vmatprep.subr.mxu0 0.0
    %194 = vmatpush2.msra.mxu0 0.0
    %195 = vmatprep.subr.mxu0 0.0
    %196 = vmatpush2.msra.mxu0 0.0
    %197 = vmatprep.subr.mxu0 0.0
    %198 = vmatpush2.msra.mxu0 0.0
    %199 = vmatprep.subr.mxu0 0.0
    %200 = vmatpush2.msra.mxu0 0.0
    %201 = vmatprep.mubr.f32.mxu0 0.0
    %202 = vmatmul.mubr.f32.gmra.mxu0 %v132
    %v203 = vpop.f32.mrf.mxu0
    %v204 = vadd.f32 0.0, %v203
    %v205 = vpop.f32.mrf.mxu0
    %206 = vmatprep.mubr.f32.mxu0 0.0
    %207 = vmatmul.mubr.f32.gmra.mxu0 %v135
    %v208 = vpop.f32.mrf.mxu0
    %v209 = vadd.f32 0.0, %v208
    %v210 = vpop.f32.mrf.mxu0
    %211 = vdwg.mxu0
    %v212 = vld [vmem:[#allocation3] sm:$0xff]
    %v213 = vld [vmem:[#allocation3 + $0x8] sm:$0xff]
    %v214 = vld [vmem:[%s3] sm:$0xff]
    %v215 = vld [vmem:[%s3 + $0x8] sm:$0xff]
    %v216 = vld [vmem:[%s3 + $0x10] sm:$0xff]
    %v217 = vld [vmem:[%s3 + $0x18] sm:$0xff]
    %v219 = vsel %vm130, %v212, 0
    %v222 = vsel %vm130, %v213, 0
    %224 = vmatprep.subr.mxu0 0.0
    %225 = vmatpush1.msra.mxu0 0.0
    %226 = vmatprep.subr.mxu0 0.0
    %227 = vmatpush1.msra.mxu0 0.0
    %228 = vmatprep.subr.mxu0 0.0
    %229 = vmatpush1.msra.mxu0 0.0
    %230 = vmatprep.subr.mxu0 0.0
    %231 = vmatpush1.msra.mxu0 0.0
    %232 = vmatprep.subr.mxu0 0.0
    %233 = vmatpush1.msra.mxu0 0.0
    %234 = vmatprep.subr.mxu0 0.0
    %235 = vmatpush1.msra.mxu0 0.0
    %236 = vmatprep.subr.mxu0 0.0
    %237 = vmatpush1.msra.mxu0 0.0
    %238 = vmatprep.subr.mxu0 0.0
    %239 = vmatpush1.msra.mxu0 0.0
    %240 = vmatprep.subr.mxu0 0.0
    %241 = vmatpush1.msra.mxu0 0.0
    %242 = vmatprep.subr.mxu0 0.0
    %243 = vmatpush1.msra.mxu0 0.0
    %244 = vmatprep.subr.mxu0 0.0
    %245 = vmatpush1.msra.mxu0 0.0
    %246 = vmatprep.subr.mxu0 0.0
    %247 = vmatpush1.msra.mxu0 0.0
    %248 = vmatprep.subr.mxu0 0.0
    %249 = vmatpush1.msra.mxu0 %v217
    %250 = vmatprep.subr.mxu0 0.0
    %251 = vmatpush1.msra.mxu0 %v216
    %252 = vmatprep.subr.mxu0 0.0
    %253 = vmatpush1.msra.mxu0 %v215
    %254 = vmatprep.subr.mxu0 0.0
    %255 = vmatpush1.msra.mxu0 %v214
    %256 = vmatprep.subr.mxu0 0.0
    %257 = vmatpush2.msra.mxu0 0.0
    %258 = vmatprep.subr.mxu0 0.0
    %259 = vmatpush2.msra.mxu0 0.0
    %260 = vmatprep.subr.mxu0 0.0
    %261 = vmatpush2.msra.mxu0 0.0
    %262 = vmatprep.subr.mxu0 0.0
    %263 = vmatpush2.msra.mxu0 0.0
    %264 = vmatprep.subr.mxu0 0.0
    %265 = vmatpush2.msra.mxu0 0.0
    %266 = vmatprep.subr.mxu0 0.0
    %267 = vmatpush2.msra.mxu0 0.0
    %268 = vmatprep.subr.mxu0 0.0
    %269 = vmatpush2.msra.mxu0 0.0
    %270 = vmatprep.subr.mxu0 0.0
    %271 = vmatpush2.msra.mxu0 0.0
    %272 = vmatprep.subr.mxu0 0.0
    %273 = vmatpush2.msra.mxu0 0.0
    %274 = vmatprep.subr.mxu0 0.0
    %275 = vmatpush2.msra.mxu0 0.0
    %276 = vmatprep.subr.mxu0 0.0
    %277 = vmatpush2.msra.mxu0 0.0
    %278 = vmatprep.subr.mxu0 0.0
    %279 = vmatpush2.msra.mxu0 0.0
    %280 = vmatprep.subr.mxu0 0.0
    %281 = vmatpush2.msra.mxu0 0.0
    %282 = vmatprep.subr.mxu0 0.0
    %283 = vmatpush2.msra.mxu0 0.0
    %284 = vmatprep.subr.mxu0 0.0
    %285 = vmatpush2.msra.mxu0 0.0
    %286 = vmatprep.subr.mxu0 0.0
    %287 = vmatpush2.msra.mxu0 0.0
    %288 = vmatprep.mubr.f32.mxu0 0.0
    %289 = vmatmul.mubr.f32.gmra.mxu0 %v219
    %v290 = vpop.f32.mrf.mxu0
    %v291 = vadd.f32 0.0, %v290
    %v292 = vpop.f32.mrf.mxu0
    %293 = vmatprep.mubr.f32.mxu0 0.0
    %294 = vmatmul.mubr.f32.gmra.mxu0 %v222
    %v295 = vpop.f32.mrf.mxu0
    %v296 = vadd.f32 0.0, %v295
    %v297 = vpop.f32.mrf.mxu0
    %298 = vdwg.mxu0
    %301 = vrot.lane.b32.xlu0 %v291, 16
    %v302 = vpop.permute.xlu0 %301
    %303 = vrot.lane.b32.xlu0 %v296, 16
    %v304 = vpop.permute.xlu0 %303
    %vm307 = vcmask 130048
    %v308 = vsel %vm307, %v204, %v302
    %v309 = vsel %vm307, %v209, %v304
    %v310 = vld [vmem:[%s5] sm:$0x1]
    %v312 = vlaneseq
    %v313 = vshrl.u32 %v312, 7
    %v314 = vsub.s32 0, %v313
    %v315 = vrot.slane %v310, %v314
    %v317 = vadd.f32 %v308, %v315
    %v318 = vadd.f32 %v309, %v315
    %v319 = vld [vmem:[%s4] sm:$0xff]
    %v320 = vld [vmem:[%s4 + $0x8] sm:$0xff]
    %v321 = vld [vmem:[%s4 + $0x10] sm:$0xff]
    %v322 = vld [vmem:[%s4 + $0x18] sm:$0xff]
    %v324 = vsel %vm130, 0.0, 0
    %326 = vmatprep.subr.mxu0 0.0
    %327 = vmatpush1.msra.mxu0 0.0
    %328 = vmatprep.subr.mxu0 0.0
    %329 = vmatpush1.msra.mxu0 0.0
    %330 = vmatprep.subr.mxu0 0.0
    %331 = vmatpush1.msra.mxu0 0.0
    %332 = vmatprep.subr.mxu0 0.0
    %333 = vmatpush1.msra.mxu0 0.0
    %334 = vmatprep.subr.mxu0 0.0
    %335 = vmatpush1.msra.mxu0 0.0
    %336 = vmatprep.subr.mxu0 0.0
    %337 = vmatpush1.msra.mxu0 0.0
    %338 = vmatprep.subr.mxu0 0.0
    %339 = vmatpush1.msra.mxu0 0.0
    %340 = vmatprep.subr.mxu0 0.0
    %341 = vmatpush1.msra.mxu0 0.0
    %342 = vmatprep.subr.mxu0 0.0
    %343 = vmatpush1.msra.mxu0 0.0
    %344 = vmatprep.subr.mxu0 0.0
    %345 = vmatpush1.msra.mxu0 0.0
    %346 = vmatprep.subr.mxu0 0.0
    %347 = vmatpush1.msra.mxu0 0.0
    %348 = vmatprep.subr.mxu0 0.0
    %349 = vmatpush1.msra.mxu0 0.0
    %350 = vmatprep.subr.mxu0 0.0
    %351 = vmatpush1.msra.mxu0 %v322
    %352 = vmatprep.subr.mxu0 0.0
    %353 = vmatpush1.msra.mxu0 %v321
    %354 = vmatprep.subr.mxu0 0.0
    %355 = vmatpush1.msra.mxu0 %v320
    %356 = vmatprep.subr.mxu0 0.0
    %357 = vmatpush1.msra.mxu0 %v319
    %358 = vmatprep.subr.mxu0 0.0
    %359 = vmatpush2.msra.mxu0 0.0
    %360 = vmatprep.subr.mxu0 0.0
    %361 = vmatpush2.msra.mxu0 0.0
    %362 = vmatprep.subr.mxu0 0.0
    %363 = vmatpush2.msra.mxu0 0.0
    %364 = vmatprep.subr.mxu0 0.0
    %365 = vmatpush2.msra.mxu0 0.0
    %366 = vmatprep.subr.mxu0 0.0
    %367 = vmatpush2.msra.mxu0 0.0
    %368 = vmatprep.subr.mxu0 0.0
    %369 = vmatpush2.msra.mxu0 0.0
    %370 = vmatprep.subr.mxu0 0.0
    %371 = vmatpush2.msra.mxu0 0.0
    %372 = vmatprep.subr.mxu0 0.0
    %373 = vmatpush2.msra.mxu0 0.0
    %374 = vmatprep.subr.mxu0 0.0
    %375 = vmatpush2.msra.mxu0 0.0
    %376 = vmatprep.subr.mxu0 0.0
    %377 = vmatpush2.msra.mxu0 0.0
    %378 = vmatprep.subr.mxu0 0.0
    %379 = vmatpush2.msra.mxu0 0.0
    %380 = vmatprep.subr.mxu0 0.0
    %381 = vmatpush2.msra.mxu0 0.0
    %382 = vmatprep.subr.mxu0 0.0
    %383 = vmatpush2.msra.mxu0 0.0
    %384 = vmatprep.subr.mxu0 0.0
    %385 = vmatpush2.msra.mxu0 0.0
    %386 = vmatprep.subr.mxu0 0.0
    %387 = vmatpush2.msra.mxu0 0.0
    %388 = vmatprep.subr.mxu0 0.0
    %389 = vmatpush2.msra.mxu0 0.0
    %390 = vmatprep.mubr.f32.mxu0 0.0
    %391 = vmatmul.mubr.f32.gmra.mxu0 %v324
    %v392 = vpop.f32.mrf.mxu0
    %v393 = vadd.f32 0.0, %v392
    %v394 = vpop.f32.mrf.mxu0
    %395 = vdwg.mxu0
    %v396 = vadd.f32 %v317, %v393
    %v397 = vmax.f32 %v396, 0.0
    %v398 = vmax.f32 %v397, 0.0
    %v400 = vsel %vm130, %v397, 0
    %402 = vmatprep.subr.mxu0 0.0
    %403 = vmatpush1.msra.mxu0 0.0
    %404 = vmatprep.subr.mxu0 0.0
    %405 = vmatpush1.msra.mxu0 0.0
    %406 = vmatprep.subr.mxu0 0.0
    %407 = vmatpush1.msra.mxu0 0.0
    %408 = vmatprep.subr.mxu0 0.0
    %409 = vmatpush1.msra.mxu0 0.0
    %410 = vmatprep.subr.mxu0 0.0
    %411 = vmatpush1.msra.mxu0 0.0
    %412 = vmatprep.subr.mxu0 0.0
    %413 = vmatpush1.msra.mxu0 0.0
    %414 = vmatprep.subr.mxu0 0.0
    %415 = vmatpush1.msra.mxu0 0.0
    %416 = vmatprep.subr.mxu0 0.0
    %417 = vmatpush1.msra.mxu0 0.0
    %418 = vmatprep.subr.mxu0 0.0
    %419 = vmatpush1.msra.mxu0 0.0
    %420 = vmatprep.subr.mxu0 0.0
    %421 = vmatpush1.msra.mxu0 0.0
    %422 = vmatprep.subr.mxu0 0.0
    %423 = vmatpush1.msra.mxu0 0.0
    %424 = vmatprep.subr.mxu0 0.0
    %425 = vmatpush1.msra.mxu0 0.0
    %426 = vmatprep.subr.mxu0 0.0
    %427 = vmatpush1.msra.mxu0 %v322
    %428 = vmatprep.subr.mxu0 0.0
    %429 = vmatpush1.msra.mxu0 %v321
    %430 = vmatprep.subr.mxu0 0.0
    %431 = vmatpush1.msra.mxu0 %v320
    %432 = vmatprep.subr.mxu0 0.0
    %433 = vmatpush1.msra.mxu0 %v319
    %434 = vmatprep.subr.mxu0 0.0
    %435 = vmatpush2.msra.mxu0 0.0
    %436 = vmatprep.subr.mxu0 0.0
    %437 = vmatpush2.msra.mxu0 0.0
    %438 = vmatprep.subr.mxu0 0.0
    %439 = vmatpush2.msra.mxu0 0.0
    %440 = vmatprep.subr.mxu0 0.0
    %441 = vmatpush2.msra.mxu0 0.0
    %442 = vmatprep.subr.mxu0 0.0
    %443 = vmatpush2.msra.mxu0 0.0
    %444 = vmatprep.subr.mxu0 0.0
    %445 = vmatpush2.msra.mxu0 0.0
    %446 = vmatprep.subr.mxu0 0.0
    %447 = vmatpush2.msra.mxu0 0.0
    %448 = vmatprep.subr.mxu0 0.0
    %449 = vmatpush2.msra.mxu0 0.0
    %450 = vmatprep.subr.mxu0 0.0
    %451 = vmatpush2.msra.mxu0 0.0
    %452 = vmatprep.subr.mxu0 0.0
    %453 = vmatpush2.msra.mxu0 0.0
    %454 = vmatprep.subr.mxu0 0.0
    %455 = vmatpush2.msra.mxu0 0.0
    %456 = vmatprep.subr.mxu0 0.0
    %457 = vmatpush2.msra.mxu0 0.0
    %458 = vmatprep.subr.mxu0 0.0
    %459 = vmatpush2.msra.mxu0 0.0
    %460 = vmatprep.subr.mxu0 0.0
    %461 = vmatpush2.msra.mxu0 0.0
    %462 = vmatprep.subr.mxu0 0.0
    %463 = vmatpush2.msra.mxu0 0.0
    %464 = vmatprep.subr.mxu0 0.0
    %465 = vmatpush2.msra.mxu0 0.0
    %466 = vmatprep.mubr.f32.mxu0 0.0
    %467 = vmatmul.mubr.f32.gmra.mxu0 %v400
    %v468 = vpop.f32.mrf.mxu0
    %v469 = vadd.f32 0.0, %v468
    %v470 = vpop.f32.mrf.mxu0
    %471 = vdwg.mxu0
    %v473 = vrot.slane %v469, 6
    %v475 = vadd.f32 %v317, %v473
    %v476 = vmax.f32 %v475, 0.0
    %v478 = vrot.slane %v476, 2
    %v480 = vmax.f32 %v398, %v478
    %v481 = vsel %vm130, %v478, 0
    %483 = vmatprep.subr.mxu0 0.0
    %484 = vmatpush1.msra.mxu0 0.0
    %485 = vmatprep.subr.mxu0 0.0
    %486 = vmatpush1.msra.mxu0 0.0
    %487 = vmatprep.subr.mxu0 0.0
    %488 = vmatpush1.msra.mxu0 0.0
    %489 = vmatprep.subr.mxu0 0.0
    %490 = vmatpush1.msra.mxu0 0.0
    %491 = vmatprep.subr.mxu0 0.0
    %492 = vmatpush1.msra.mxu0 0.0
    %493 = vmatprep.subr.mxu0 0.0
    %494 = vmatpush1.msra.mxu0 0.0
    %495 = vmatprep.subr.mxu0 0.0
    %496 = vmatpush1.msra.mxu0 0.0
    %497 = vmatprep.subr.mxu0 0.0
    %498 = vmatpush1.msra.mxu0 0.0
    %499 = vmatprep.subr.mxu0 0.0
    %500 = vmatpush1.msra.mxu0 0.0
    %501 = vmatprep.subr.mxu0 0.0
    %502 = vmatpush1.msra.mxu0 0.0
    %503 = vmatprep.subr.mxu0 0.0
    %504 = vmatpush1.msra.mxu0 0.0
    %505 = vmatprep.subr.mxu0 0.0
    %506 = vmatpush1.msra.mxu0 0.0
    %507 = vmatprep.subr.mxu0 0.0
    %508 = vmatpush1.msra.mxu0 %v322
    %509 = vmatprep.subr.mxu0 0.0
    %510 = vmatpush1.msra.mxu0 %v321
    %511 = vmatprep.subr.mxu0 0.0
    %512 = vmatpush1.msra.mxu0 %v320
    %513 = vmatprep.subr.mxu0 0.0
    %514 = vmatpush1.msra.mxu0 %v319
    %515 = vmatprep.subr.mxu0 0.0
    %516 = vmatpush2.msra.mxu0 0.0
    %517 = vmatprep.subr.mxu0 0.0
    %518 = vmatpush2.msra.mxu0 0.0
    %519 = vmatprep.subr.mxu0 0.0
    %520 = vmatpush2.msra.mxu0 0.0
    %521 = vmatprep.subr.mxu0 0.0
    %522 = vmatpush2.msra.mxu0 0.0
    %523 = vmatprep.subr.mxu0 0.0
    %524 = vmatpush2.msra.mxu0 0.0
    %525 = vmatprep.subr.mxu0 0.0
    %526 = vmatpush2.msra.mxu0 0.0
    %527 = vmatprep.subr.mxu0 0.0
    %528 = vmatpush2.msra.mxu0 0.0
    %529 = vmatprep.subr.mxu0 0.0
    %530 = vmatpush2.msra.mxu0 0.0
    %531 = vmatprep.subr.mxu0 0.0
    %532 = vmatpush2.msra.mxu0 0.0
    %533 = vmatprep.subr.mxu0 0.0
    %534 = vmatpush2.msra.mxu0 0.0
    %535 = vmatprep.subr.mxu0 0.0
    %536 = vmatpush2.msra.mxu0 0.0
    %537 = vmatprep.subr.mxu0 0.0
    %538 = vmatpush2.msra.mxu0 0.0
    %539 = vmatprep.subr.mxu0 0.0
    %540 = vmatpush2.msra.mxu0 0.0
    %541 = vmatprep.subr.mxu0 0.0
    %542 = vmatpush2.msra.mxu0 0.0
    %543 = vmatprep.subr.mxu0 0.0
    %544 = vmatpush2.msra.mxu0 0.0
    %545 = vmatprep.subr.mxu0 0.0
    %546 = vmatpush2.msra.mxu0 0.0
    %547 = vmatprep.mubr.f32.mxu0 0.0
    %548 = vmatmul.mubr.f32.gmra.mxu0 %v481
    %v549 = vpop.f32.mrf.mxu0
    %v550 = vadd.f32 0.0, %v549
    %v551 = vpop.f32.mrf.mxu0
    %552 = vdwg.mxu0
    %v554 = vrot.slane %v550, 4
    %v556 = vadd.f32 %v317, %v554
    %v557 = vmax.f32 %v556, 0.0
    %v559 = vrot.slane %v557, 4
    %v561 = vmax.f32 %v480, %v559
    %v562 = vsel %vm130, %v559, 0
    %564 = vmatprep.subr.mxu0 0.0
    %565 = vmatpush1.msra.mxu0 0.0
    %566 = vmatprep.subr.mxu0 0.0
    %567 = vmatpush1.msra.mxu0 0.0
    %568 = vmatprep.subr.mxu0 0.0
    %569 = vmatpush1.msra.mxu0 0.0
    %570 = vmatprep.subr.mxu0 0.0
    %571 = vmatpush1.msra.mxu0 0.0
    %572 = vmatprep.subr.mxu0 0.0
    %573 = vmatpush1.msra.mxu0 0.0
    %574 = vmatprep.subr.mxu0 0.0
    %575 = vmatpush1.msra.mxu0 0.0
    %576 = vmatprep.subr.mxu0 0.0
    %577 = vmatpush1.msra.mxu0 0.0
    %578 = vmatprep.subr.mxu0 0.0
    %579 = vmatpush1.msra.mxu0 0.0
    %580 = vmatprep.subr.mxu0 0.0
    %581 = vmatpush1.msra.mxu0 0.0
    %582 = vmatprep.subr.mxu0 0.0
    %583 = vmatpush1.msra.mxu0 0.0
    %584 = vmatprep.subr.mxu0 0.0
    %585 = vmatpush1.msra.mxu0 0.0
    %586 = vmatprep.subr.mxu0 0.0
    %587 = vmatpush1.msra.mxu0 0.0
    %588 = vmatprep.subr.mxu0 0.0
    %589 = vmatpush1.msra.mxu0 %v322
    %590 = vmatprep.subr.mxu0 0.0
    %591 = vmatpush1.msra.mxu0 %v321
    %592 = vmatprep.subr.mxu0 0.0
    %593 = vmatpush1.msra.mxu0 %v320
    %594 = vmatprep.subr.mxu0 0.0
    %595 = vmatpush1.msra.mxu0 %v319
    %596 = vmatprep.subr.mxu0 0.0
    %597 = vmatpush2.msra.mxu0 0.0
    %598 = vmatprep.subr.mxu0 0.0
    %599 = vmatpush2.msra.mxu0 0.0
    %600 = vmatprep.subr.mxu0 0.0
    %601 = vmatpush2.msra.mxu0 0.0
    %602 = vmatprep.subr.mxu0 0.0
    %603 = vmatpush2.msra.mxu0 0.0
    %604 = vmatprep.subr.mxu0 0.0
    %605 = vmatpush2.msra.mxu0 0.0
    %606 = vmatprep.subr.mxu0 0.0
    %607 = vmatpush2.msra.mxu0 0.0
    %608 = vmatprep.subr.mxu0 0.0
    %609 = vmatpush2.msra.mxu0 0.0
    %610 = vmatprep.subr.mxu0 0.0
    %611 = vmatpush2.msra.mxu0 0.0
    %612 = vmatprep.subr.mxu0 0.0
    %613 = vmatpush2.msra.mxu0 0.0
    %614 = vmatprep.subr.mxu0 0.0
    %615 = vmatpush2.msra.mxu0 0.0
    %616 = vmatprep.subr.mxu0 0.0
    %617 = vmatpush2.msra.mxu0 0.0
    %618 = vmatprep.subr.mxu0 0.0
    %619 = vmatpush2.msra.mxu0 0.0
    %620 = vmatprep.subr.mxu0 0.0
    %621 = vmatpush2.msra.mxu0 0.0
    %622 = vmatprep.subr.mxu0 0.0
    %623 = vmatpush2.msra.mxu0 0.0
    %624 = vmatprep.subr.mxu0 0.0
    %625 = vmatpush2.msra.mxu0 0.0
    %626 = vmatprep.subr.mxu0 0.0
    %627 = vmatpush2.msra.mxu0 0.0
    %628 = vmatprep.mubr.f32.mxu0 0.0
    %629 = vmatmul.mubr.f32.gmra.mxu0 %v562
    %v630 = vpop.f32.mrf.mxu0
    %v631 = vadd.f32 0.0, %v630
    %v632 = vpop.f32.mrf.mxu0
    %633 = vdwg.mxu0
    %v635 = vrot.slane %v631, 2
    %v637 = vadd.f32 %v317, %v635
    %v638 = vmax.f32 %v637, 0.0
    %v640 = vrot.slane %v638, 6
    %v642 = vmax.f32 %v561, %v640
    %v643 = vsel %vm130, %v640, 0
    %645 = vmatprep.subr.mxu0 0.0
    %646 = vmatpush1.msra.mxu0 0.0
    %647 = vmatprep.subr.mxu0 0.0
    %648 = vmatpush1.msra.mxu0 0.0
    %649 = vmatprep.subr.mxu0 0.0
    %650 = vmatpush1.msra.mxu0 0.0
    %651 = vmatprep.subr.mxu0 0.0
    %652 = vmatpush1.msra.mxu0 0.0
    %653 = vmatprep.subr.mxu0 0.0
    %654 = vmatpush1.msra.mxu0 0.0
    %655 = vmatprep.subr.mxu0 0.0
    %656 = vmatpush1.msra.mxu0 0.0
    %657 = vmatprep.subr.mxu0 0.0
    %658 = vmatpush1.msra.mxu0 0.0
    %659 = vmatprep.subr.mxu0 0.0
    %660 = vmatpush1.msra.mxu0 0.0
    %661 = vmatprep.subr.mxu0 0.0
    %662 = vmatpush1.msra.mxu0 0.0
    %663 = vmatprep.subr.mxu0 0.0
    %664 = vmatpush1.msra.mxu0 0.0
    %665 = vmatprep.subr.mxu0 0.0
    %666 = vmatpush1.msra.mxu0 0.0
    %667 = vmatprep.subr.mxu0 0.0
    %668 = vmatpush1.msra.mxu0 0.0
    %669 = vmatprep.subr.mxu0 0.0
    %670 = vmatpush1.msra.mxu0 %v322
    %671 = vmatprep.subr.mxu0 0.0
    %672 = vmatpush1.msra.mxu0 %v321
    %673 = vmatprep.subr.mxu0 0.0
    %674 = vmatpush1.msra.mxu0 %v320
    %675 = vmatprep.subr.mxu0 0.0
    %676 = vmatpush1.msra.mxu0 %v319
    %677 = vmatprep.subr.mxu0 0.0
    %678 = vmatpush2.msra.mxu0 0.0
    %679 = vmatprep.subr.mxu0 0.0
    %680 = vmatpush2.msra.mxu0 0.0
    %681 = vmatprep.subr.mxu0 0.0
    %682 = vmatpush2.msra.mxu0 0.0
    %683 = vmatprep.subr.mxu0 0.0
    %684 = vmatpush2.msra.mxu0 0.0
    %685 = vmatprep.subr.mxu0 0.0
    %686 = vmatpush2.msra.mxu0 0.0
    %687 = vmatprep.subr.mxu0 0.0
    %688 = vmatpush2.msra.mxu0 0.0
    %689 = vmatprep.subr.mxu0 0.0
    %690 = vmatpush2.msra.mxu0 0.0
    %691 = vmatprep.subr.mxu0 0.0
    %692 = vmatpush2.msra.mxu0 0.0
    %693 = vmatprep.subr.mxu0 0.0
    %694 = vmatpush2.msra.mxu0 0.0
    %695 = vmatprep.subr.mxu0 0.0
    %696 = vmatpush2.msra.mxu0 0.0
    %697 = vmatprep.subr.mxu0 0.0
    %698 = vmatpush2.msra.mxu0 0.0
    %699 = vmatprep.subr.mxu0 0.0
    %700 = vmatpush2.msra.mxu0 0.0
    %701 = vmatprep.subr.mxu0 0.0
    %702 = vmatpush2.msra.mxu0 0.0
    %703 = vmatprep.subr.mxu0 0.0
    %704 = vmatpush2.msra.mxu0 0.0
    %705 = vmatprep.subr.mxu0 0.0
    %706 = vmatpush2.msra.mxu0 0.0
    %707 = vmatprep.subr.mxu0 0.0
    %708 = vmatpush2.msra.mxu0 0.0
    %709 = vmatprep.mubr.f32.mxu0 0.0
    %710 = vmatmul.mubr.f32.gmra.mxu0 %v643
    %v711 = vpop.f32.mrf.mxu0
    %v712 = vadd.f32 0.0, %v711
    %v713 = vpop.f32.mrf.mxu0
    %714 = vdwg.mxu0
    %v715 = vadd.f32 %v318, %v712
    %v716 = vmax.f32 %v715, 0.0
    %v717 = vmax.f32 %v642, %v716
    %v719 = vsel %vm130, %v716, 0
    %721 = vmatprep.subr.mxu0 0.0
    %722 = vmatpush1.msra.mxu0 0.0
    %723 = vmatprep.subr.mxu0 0.0
    %724 = vmatpush1.msra.mxu0 0.0
    %725 = vmatprep.subr.mxu0 0.0
    %726 = vmatpush1.msra.mxu0 0.0
    %727 = vmatprep.subr.mxu0 0.0
    %728 = vmatpush1.msra.mxu0 0.0
    %729 = vmatprep.subr.mxu0 0.0
    %730 = vmatpush1.msra.mxu0 0.0
    %731 = vmatprep.subr.mxu0 0.0
    %732 = vmatpush1.msra.mxu0 0.0
    %733 = vmatprep.subr.mxu0 0.0
    %734 = vmatpush1.msra.mxu0 0.0
    %735 = vmatprep.subr.mxu0 0.0
    %736 = vmatpush1.msra.mxu0 0.0
    %737 = vmatprep.subr.mxu0 0.0
    %738 = vmatpush1.msra.mxu0 0.0
    %739 = vmatprep.subr.mxu0 0.0
    %740 = vmatpush1.msra.mxu0 0.0
    %741 = vmatprep.subr.mxu0 0.0
    %742 = vmatpush1.msra.mxu0 0.0
    %743 = vmatprep.subr.mxu0 0.0
    %744 = vmatpush1.msra.mxu0 0.0
    %745 = vmatprep.subr.mxu0 0.0
    %746 = vmatpush1.msra.mxu0 %v322
    %747 = vmatprep.subr.mxu0 0.0
    %748 = vmatpush1.msra.mxu0 %v321
    %749 = vmatprep.subr.mxu0 0.0
    %750 = vmatpush1.msra.mxu0 %v320
    %751 = vmatprep.subr.mxu0 0.0
    %752 = vmatpush1.msra.mxu0 %v319
    %753 = vmatprep.subr.mxu0 0.0
    %754 = vmatpush2.msra.mxu0 0.0
    %755 = vmatprep.subr.mxu0 0.0
    %756 = vmatpush2.msra.mxu0 0.0
    %757 = vmatprep.subr.mxu0 0.0
    %758 = vmatpush2.msra.mxu0 0.0
    %759 = vmatprep.subr.mxu0 0.0
    %760 = vmatpush2.msra.mxu0 0.0
    %761 = vmatprep.subr.mxu0 0.0
    %762 = vmatpush2.msra.mxu0 0.0
    %763 = vmatprep.subr.mxu0 0.0
    %764 = vmatpush2.msra.mxu0 0.0
    %765 = vmatprep.subr.mxu0 0.0
    %766 = vmatpush2.msra.mxu0 0.0
    %767 = vmatprep.subr.mxu0 0.0
    %768 = vmatpush2.msra.mxu0 0.0
    %769 = vmatprep.subr.mxu0 0.0
    %770 = vmatpush2.msra.mxu0 0.0
    %771 = vmatprep.subr.mxu0 0.0
    %772 = vmatpush2.msra.mxu0 0.0
    %773 = vmatprep.subr.mxu0 0.0
    %774 = vmatpush2.msra.mxu0 0.0
    %775 = vmatprep.subr.mxu0 0.0
    %776 = vmatpush2.msra.mxu0 0.0
    %777 = vmatprep.subr.mxu0 0.0
    %778 = vmatpush2.msra.mxu0 0.0
    %779 = vmatprep.subr.mxu0 0.0
    %780 = vmatpush2.msra.mxu0 0.0
    %781 = vmatprep.subr.mxu0 0.0
    %782 = vmatpush2.msra.mxu0 0.0
    %783 = vmatprep.subr.mxu0 0.0
    %784 = vmatpush2.msra.mxu0 0.0
    %785 = vmatprep.mubr.f32.mxu0 0.0
    %786 = vmatmul.mubr.f32.gmra.mxu0 %v719
    %v787 = vpop.f32.mrf.mxu0
    %v788 = vadd.f32 0.0, %v787
    %v789 = vpop.f32.mrf.mxu0
    %790 = vdwg.mxu0
    %v792 = vrot.slane %v788, 6
    %v794 = vadd.f32 %v318, %v792
    %v795 = vmax.f32 %v794, 0.0
    %v797 = vrot.slane %v795, 2
    %v799 = vmax.f32 %v717, %v797
    %v800 = vsel %vm130, %v797, 0
    %802 = vmatprep.subr.mxu0 0.0
    %803 = vmatpush1.msra.mxu0 0.0
    %804 = vmatprep.subr.mxu0 0.0
    %805 = vmatpush1.msra.mxu0 0.0
    %806 = vmatprep.subr.mxu0 0.0
    %807 = vmatpush1.msra.mxu0 0.0
    %808 = vmatprep.subr.mxu0 0.0
    %809 = vmatpush1.msra.mxu0 0.0
    %810 = vmatprep.subr.mxu0 0.0
    %811 = vmatpush1.msra.mxu0 0.0
    %812 = vmatprep.subr.mxu0 0.0
    %813 = vmatpush1.msra.mxu0 0.0
    %814 = vmatprep.subr.mxu0 0.0
    %815 = vmatpush1.msra.mxu0 0.0
    %816 = vmatprep.subr.mxu0 0.0
    %817 = vmatpush1.msra.mxu0 0.0
    %818 = vmatprep.subr.mxu0 0.0
    %819 = vmatpush1.msra.mxu0 0.0
    %820 = vmatprep.subr.mxu0 0.0
    %821 = vmatpush1.msra.mxu0 0.0
    %822 = vmatprep.subr.mxu0 0.0
    %823 = vmatpush1.msra.mxu0 0.0
    %824 = vmatprep.subr.mxu0 0.0
    %825 = vmatpush1.msra.mxu0 0.0
    %826 = vmatprep.subr.mxu0 0.0
    %827 = vmatpush1.msra.mxu0 %v322
    %828 = vmatprep.subr.mxu0 0.0
    %829 = vmatpush1.msra.mxu0 %v321
    %830 = vmatprep.subr.mxu0 0.0
    %831 = vmatpush1.msra.mxu0 %v320
    %832 = vmatprep.subr.mxu0 0.0
    %833 = vmatpush1.msra.mxu0 %v319
    %834 = vmatprep.subr.mxu0 0.0
    %835 = vmatpush2.msra.mxu0 0.0
    %836 = vmatprep.subr.mxu0 0.0
    %837 = vmatpush2.msra.mxu0 0.0
    %838 = vmatprep.subr.mxu0 0.0
    %839 = vmatpush2.msra.mxu0 0.0
    %840 = vmatprep.subr.mxu0 0.0
    %841 = vmatpush2.msra.mxu0 0.0
    %842 = vmatprep.subr.mxu0 0.0
    %843 = vmatpush2.msra.mxu0 0.0
    %844 = vmatprep.subr.mxu0 0.0
    %845 = vmatpush2.msra.mxu0 0.0
    %846 = vmatprep.subr.mxu0 0.0
    %847 = vmatpush2.msra.mxu0 0.0
    %848 = vmatprep.subr.mxu0 0.0
    %849 = vmatpush2.msra.mxu0 0.0
    %850 = vmatprep.subr.mxu0 0.0
    %851 = vmatpush2.msra.mxu0 0.0
    %852 = vmatprep.subr.mxu0 0.0
    %853 = vmatpush2.msra.mxu0 0.0
    %854 = vmatprep.subr.mxu0 0.0
    %855 = vmatpush2.msra.mxu0 0.0
    %856 = vmatprep.subr.mxu0 0.0
    %857 = vmatpush2.msra.mxu0 0.0
    %858 = vmatprep.subr.mxu0 0.0
    %859 = vmatpush2.msra.mxu0 0.0
    %860 = vmatprep.subr.mxu0 0.0
    %861 = vmatpush2.msra.mxu0 0.0
    %862 = vmatprep.subr.mxu0 0.0
    %863 = vmatpush2.msra.mxu0 0.0
    %864 = vmatprep.subr.mxu0 0.0
    %865 = vmatpush2.msra.mxu0 0.0
    %866 = vmatprep.mubr.f32.mxu0 0.0
    %867 = vmatmul.mubr.f32.gmra.mxu0 %v800
    %v868 = vpop.f32.mrf.mxu0
    %v869 = vadd.f32 0.0, %v868
    %v870 = vpop.f32.mrf.mxu0
    %871 = vdwg.mxu0
    %v873 = vrot.slane %v869, 4
    %v875 = vadd.f32 %v318, %v873
    %v876 = vmax.f32 %v875, 0.0
    %v878 = vrot.slane %v876, 4
    %v880 = vmax.f32 %v799, %v878
    %v881 = vsel %vm130, %v878, 0
    %883 = vmatprep.subr.mxu0 0.0
    %884 = vmatpush1.msra.mxu0 0.0
    %885 = vmatprep.subr.mxu0 0.0
    %886 = vmatpush1.msra.mxu0 0.0
    %887 = vmatprep.subr.mxu0 0.0
    %888 = vmatpush1.msra.mxu0 0.0
    %889 = vmatprep.subr.mxu0 0.0
    %890 = vmatpush1.msra.mxu0 0.0
    %891 = vmatprep.subr.mxu0 0.0
    %892 = vmatpush1.msra.mxu0 0.0
    %893 = vmatprep.subr.mxu0 0.0
    %894 = vmatpush1.msra.mxu0 0.0
    %895 = vmatprep.subr.mxu0 0.0
    %896 = vmatpush1.msra.mxu0 0.0
    %897 = vmatprep.subr.mxu0 0.0
    %898 = vmatpush1.msra.mxu0 0.0
    %899 = vmatprep.subr.mxu0 0.0
    %900 = vmatpush1.msra.mxu0 0.0
    %901 = vmatprep.subr.mxu0 0.0
    %902 = vmatpush1.msra.mxu0 0.0
    %903 = vmatprep.subr.mxu0 0.0
    %904 = vmatpush1.msra.mxu0 0.0
    %905 = vmatprep.subr.mxu0 0.0
    %906 = vmatpush1.msra.mxu0 0.0
    %907 = vmatprep.subr.mxu0 0.0
    %908 = vmatpush1.msra.mxu0 %v322
    %909 = vmatprep.subr.mxu0 0.0
    %910 = vmatpush1.msra.mxu0 %v321
    %911 = vmatprep.subr.mxu0 0.0
    %912 = vmatpush1.msra.mxu0 %v320
    %913 = vmatprep.subr.mxu0 0.0
    %914 = vmatpush1.msra.mxu0 %v319
    %915 = vmatprep.subr.mxu0 0.0
    %916 = vmatpush2.msra.mxu0 0.0
    %917 = vmatprep.subr.mxu0 0.0
    %918 = vmatpush2.msra.mxu0 0.0
    %919 = vmatprep.subr.mxu0 0.0
    %920 = vmatpush2.msra.mxu0 0.0
    %921 = vmatprep.subr.mxu0 0.0
    %922 = vmatpush2.msra.mxu0 0.0
    %923 = vmatprep.subr.mxu0 0.0
    %924 = vmatpush2.msra.mxu0 0.0
    %925 = vmatprep.subr.mxu0 0.0
    %926 = vmatpush2.msra.mxu0 0.0
    %927 = vmatprep.subr.mxu0 0.0
    %928 = vmatpush2.msra.mxu0 0.0
    %929 = vmatprep.subr.mxu0 0.0
    %930 = vmatpush2.msra.mxu0 0.0
    %931 = vmatprep.subr.mxu0 0.0
    %932 = vmatpush2.msra.mxu0 0.0
    %933 = vmatprep.subr.mxu0 0.0
    %934 = vmatpush2.msra.mxu0 0.0
    %935 = vmatprep.subr.mxu0 0.0
    %936 = vmatpush2.msra.mxu0 0.0
    %937 = vmatprep.subr.mxu0 0.0
    %938 = vmatpush2.msra.mxu0 0.0
    %939 = vmatprep.subr.mxu0 0.0
    %940 = vmatpush2.msra.mxu0 0.0
    %941 = vmatprep.subr.mxu0 0.0
    %942 = vmatpush2.msra.mxu0 0.0
    %943 = vmatprep.subr.mxu0 0.0
    %944 = vmatpush2.msra.mxu0 0.0
    %945 = vmatprep.subr.mxu0 0.0
    %946 = vmatpush2.msra.mxu0 0.0
    %947 = vmatprep.mubr.f32.mxu0 0.0
    %948 = vmatmul.mubr.f32.gmra.mxu0 %v881
    %v949 = vpop.f32.mrf.mxu0
    %v950 = vadd.f32 0.0, %v949
    %v951 = vpop.f32.mrf.mxu0
    %952 = vdwg.mxu0
    %v954 = vrot.slane %v950, 2
    %v956 = vadd.f32 %v318, %v954
    %v957 = vmax.f32 %v956, 0.0
    %v959 = vrot.slane %v957, 6
    %v961 = vmax.f32 %v880, %v959
    %v962 = vtanh.pop %v961
    %v963 = vld [vmem:[%s6] sm:$0xff]
    %v964 = vld [vmem:[%s6 + $0x8] sm:$0xff]
    %v965 = vld [vmem:[%s6 + $0x10] sm:$0xff]
    %v966 = vld [vmem:[%s6 + $0x18] sm:$0xff]
    %v967 = vld [vmem:[%s7] sm:$0x1]
    %v969 = vlaneseq
    %v970 = vshrl.u32 %v969, 7
    %v971 = vsub.s32 0, %v970
    %v972 = vrot.slane %v967, %v971
    %v975 = vsel %vm130, %v962, 0
    %977 = vmatprep.subr.mxu0 0.0
    %978 = vmatpush1.msra.mxu0 0.0
    %979 = vmatprep.subr.mxu0 0.0
    %980 = vmatpush1.msra.mxu0 0.0
    %981 = vmatprep.subr.mxu0 0.0
    %982 = vmatpush1.msra.mxu0 0.0
    %983 = vmatprep.subr.mxu0 0.0
    %984 = vmatpush1.msra.mxu0 0.0
    %985 = vmatprep.subr.mxu0 0.0
    %986 = vmatpush1.msra.mxu0 0.0
    %987 = vmatprep.subr.mxu0 0.0
    %988 = vmatpush1.msra.mxu0 0.0
    %989 = vmatprep.subr.mxu0 0.0
    %990 = vmatpush1.msra.mxu0 0.0
    %991 = vmatprep.subr.mxu0 0.0
    %992 = vmatpush1.msra.mxu0 0.0
    %993 = vmatprep.subr.mxu0 0.0
    %994 = vmatpush1.msra.mxu0 0.0
    %995 = vmatprep.subr.mxu0 0.0
    %996 = vmatpush1.msra.mxu0 0.0
    %997 = vmatprep.subr.mxu0 0.0
    %998 = vmatpush1.msra.mxu0 0.0
    %999 = vmatprep.subr.mxu0 0.0
    %1000 = vmatpush1.msra.mxu0 0.0
    %1001 = vmatprep.subr.mxu0 0.0
    %1002 = vmatpush1.msra.mxu0 %v966
    %1003 = vmatprep.subr.mxu0 0.0
    %1004 = vmatpush1.msra.mxu0 %v965
    %1005 = vmatprep.subr.mxu0 0.0
    %1006 = vmatpush1.msra.mxu0 %v964
    %1007 = vmatprep.subr.mxu0 0.0
    %1008 = vmatpush1.msra.mxu0 %v963
    %1009 = vmatprep.subr.mxu0 0.0
    %1010 = vmatpush2.msra.mxu0 0.0
    %1011 = vmatprep.subr.mxu0 0.0
    %1012 = vmatpush2.msra.mxu0 0.0
    %1013 = vmatprep.subr.mxu0 0.0
    %1014 = vmatpush2.msra.mxu0 0.0
    %1015 = vmatprep.subr.mxu0 0.0
    %1016 = vmatpush2.msra.mxu0 0.0
    %1017 = vmatprep.subr.mxu0 0.0
    %1018 = vmatpush2.msra.mxu0 0.0
    %1019 = vmatprep.subr.mxu0 0.0
    %1020 = vmatpush2.msra.mxu0 0.0
    %1021 = vmatprep.subr.mxu0 0.0
    %1022 = vmatpush2.msra.mxu0 0.0
    %1023 = vmatprep.subr.mxu0 0.0
    %1024 = vmatpush2.msra.mxu0 0.0
    %1025 = vmatprep.subr.mxu0 0.0
    %1026 = vmatpush2.msra.mxu0 0.0
    %1027 = vmatprep.subr.mxu0 0.0
    %1028 = vmatpush2.msra.mxu0 0.0
    %1029 = vmatprep.subr.mxu0 0.0
    %1030 = vmatpush2.msra.mxu0 0.0
    %1031 = vmatprep.subr.mxu0 0.0
    %1032 = vmatpush2.msra.mxu0 0.0
    %1033 = vmatprep.subr.mxu0 0.0
    %1034 = vmatpush2.msra.mxu0 0.0
    %1035 = vmatprep.subr.mxu0 0.0
    %1036 = vmatpush2.msra.mxu0 0.0
    %1037 = vmatprep.subr.mxu0 0.0
    %1038 = vmatpush2.msra.mxu0 0.0
    %1039 = vmatprep.subr.mxu0 0.0
    %1040 = vmatpush2.msra.mxu0 0.0
    %1041 = vmatprep.mubr.f32.mxu0 0.0
    %1042 = vmatmul.mubr.f32.gmra.mxu0 %v975
    %v1043 = vpop.f32.mrf.mxu0
    %v1044 = vadd.f32 %v972, %v1043
    %v1045 = vpop.f32.mrf.mxu0
    %1046 = vdwg.mxu0
    %vm1047 = vcmask 74752
    %1048 = vst.msk [vmem:[#allocation7] sm:$0x3] %vm1047, %v1044
    // Predicated region
    $region38: #{rrn_forward.1} parent=1 // pred_check
      _
    $region39: #{rrn_forward.1} parent=1 // pred_check_branch
      %1050 = sbr.rel (0) target = $region41
    $region40: #{rrn_forward.1} parent=1 // pred_region
      %s1052 = ssub.s32 32, 32
      %1053 = vsyncadd [#allocation5], %s1052
      %s1055 = sshll.u32 [#allocation7], 4
      %s1056 = int_to_ptr.vmem [resolvable:$true] %s1055
      %1058 = dma.vmem_to_hbm [thread:$0]  %s1056, 32, %s8, [#allocation5]
    $region41: #{rrn_forward.1} parent=1 // pred_fallthru
      _
    // Predicated region
    $region42: #{rrn_forward.1} parent=1 // pred_check
      _
    $region43: #{rrn_forward.1} parent=1 // pred_check_branch
      %1060 = sbr.rel (0) target = $region45
    $region44: #{rrn_forward.1} parent=1 // pred_region
      %1061 = dma.done [#allocation5], 32
    $region45: #{rrn_forward.1} parent=1 // pred_fallthru
      _
    %1062 = vsyncpa [#allocation5], 1
    %1063 = vsyncpa [#allocation6], 1

</llo_original>
